<compile_context>
chip_gen: v5e
topology: v5e:2x2
jax: 0.10.0
libtpu: 0.0.40
codegen_flags: <defaults>
</compile_context>

<pallas_src>
import functools

import numpy as np
import jax
import jax.numpy as jnp
from jax import lax
from jax.experimental import pallas as pl
from jax.experimental.pallas import tpu as pltpu

LANE = 128


def _cparams(n_grid_dims):
    return pltpu.CompilerParams(
        dimension_semantics=("parallel",) * n_grid_dims,
        vmem_limit_bytes=32 * 1024 * 1024,
    )


def _row_tiling(m, cap=512):
    """Row tile (multiple of 16, <= cap) giving an even (>=2) number of grid
    steps: both v7x TensorCores get work and no single whole-array block can
    exceed v7x's 64 MiB VMEM."""
    tm = max(16, min(cap, ((m // 2) // 16) * 16))
    steps = max(2, -(-m // tm))
    if steps % 2:
        steps += 1
    return tm, steps * tm


def _pad_rows(x, m_pad):
    m = x.shape[0]
    if m_pad == m:
        return x
    return jnp.pad(x, ((0, m_pad - m),) + ((0, 0),) * (x.ndim - 1))


# ----------------------------- Pallas kernels ------------------------------

def _ext_rpn_kernel(x_ref, we_ref, be_ref, wr_ref, br_ref, wh_ref, bh_ref,
                    feat_ref, rpn_ref, *, c_in):
    # extractor 1x1 conv: K=c_in(=4) contraction done as VPU broadcast-FMAs
    # (a degenerate K=4 MXU pass would waste a full MXU issue/drain).
    x = x_ref[...]
    we = we_ref[...]
    feat = x[:, 0:1] * we[0:1, :]
    for c in range(1, c_in):
        feat = feat + x[:, c:c + 1] * we[c:c + 1, :]
    feat = jnp.maximum(feat + be_ref[...], 0.0)
    fb = feat.astype(jnp.bfloat16)
    feat_ref[...] = fb
    # RPN conv + fused loc|score heads: bf16 MXU inputs, f32 accumulation.
    h = jnp.maximum(
        jnp.dot(fb, wr_ref[...], preferred_element_type=jnp.float32)
        + br_ref[...], 0.0)
    rpn_ref[...] = (
        jnp.dot(h.astype(jnp.bfloat16), wh_ref[...],
                preferred_element_type=jnp.float32) + bh_ref[...])


def pallas_ext_rpn(x, we, be, wr, br, wh, bh):
    m, c_in = x.shape
    cp = wr.shape[1]
    no = wh.shape[1]
    tm, m_pad = _row_tiling(m)
    xp = _pad_rows(x, m_pad)
    grid = (m_pad // tm,)

    def fixed(a):
        return pl.BlockSpec(a.shape, lambda i: (0,) * a.ndim)

    feat, rpn = pl.pallas_call(
        functools.partial(_ext_rpn_kernel, c_in=c_in),
        grid=grid,
        in_specs=[pl.BlockSpec((tm, c_in), lambda i: (i, 0)),
                  fixed(we), fixed(be), fixed(wr), fixed(br), fixed(wh), fixed(bh)],
        out_specs=[pl.BlockSpec((tm, cp), lambda i: (i, 0)),
                   pl.BlockSpec((tm, no), lambda i: (i, 0))],
        out_shape=(jax.ShapeDtypeStruct((m_pad, cp), jnp.bfloat16),
                   jax.ShapeDtypeStruct((m_pad, no), jnp.float32)),
        compiler_params=_cparams(1),
    )(xp, we, be, wr, br, wh, bh)
    return feat[:m], rpn[:m]


def _head_kernel(himg_ref, roi_ref, wroi_ref, bfc_ref, wcls_ref, bcls_ref,
                 o_ref, *, n_coord):
    # per-image pooled-feature contribution (himg) computed once per image
    # outside; only the 4 ROI-coordinate FMAs differ per row, so the contraction
    # stays at 128 lanes and pooled features are never broadcast over s_pad rows.
    roi = roi_ref[...]                               # (s_pad, 4)
    wroi = wroi_ref[...]                             # (4, h_pad)
    hr = roi[:, 0:1] * wroi[0:1, :]
    for c in range(1, n_coord):
        hr = hr + roi[:, c:c + 1] * wroi[c:c + 1, :]
    h = jnp.maximum(hr + himg_ref[...] + bfc_ref[...], 0.0)
    o_ref[...] = (
        jnp.dot(h.astype(jnp.bfloat16), wcls_ref[...],
                preferred_element_type=jnp.float32) + bcls_ref[...])


def pallas_head(h_img, roi_norm, wroi, bfc, wcls, bcls):
    n, s_pad, n_coord = roi_norm.shape
    h_pad = wroi.shape[1]
    o_pad = wcls.shape[1]
    himg3 = h_img.reshape(n, 1, h_pad)
    return pl.pallas_call(
        functools.partial(_head_kernel, n_coord=n_coord),
        grid=(n,),
        in_specs=[pl.BlockSpec((None, 1, h_pad), lambda i: (i, 0, 0)),
                  pl.BlockSpec((None, s_pad, n_coord), lambda i: (i, 0, 0)),
                  pl.BlockSpec(wroi.shape, lambda i: (0, 0)),
                  pl.BlockSpec(bfc.shape, lambda i: (0, 0)),
                  pl.BlockSpec(wcls.shape, lambda i: (0, 0)),
                  pl.BlockSpec(bcls.shape, lambda i: (0, 0))],
        out_specs=pl.BlockSpec((None, s_pad, o_pad), lambda i: (i, 0, 0)),
        out_shape=jax.ShapeDtypeStruct((n, s_pad, o_pad), jnp.float32),
        compiler_params=_cparams(1),
    )(himg3, roi_norm, wroi, bfc, wcls, bcls)


def _pair_iou_kernel(anc_ref, roit_ref, box_ref, o_anc_ref, o_roi_ref):
    # gt boxes for this image loaded once, used for both IoU matrices.
    b = box_ref[...]                                 # (NBp, 4)
    bx1, by1, bx2, by2 = b[:, 0:1], b[:, 1:2], b[:, 2:3], b[:, 3:4]
    area_b = (bx2 - bx1) * (by2 - by1)

    def iou(at):                                     # at: (4, Np)
        ax1, ay1, ax2, ay2 = at[0:1, :], at[1:2, :], at[2:3, :], at[3:4, :]
        tlx = jnp.maximum(ax1, bx1)
        tly = jnp.maximum(ay1, by1)
        brx = jnp.minimum(ax2, bx2)
        bry = jnp.minimum(ay2, by2)
        inter = (brx - tlx) * (bry - tly)
        valid = jnp.logical_and(tlx < brx, tly < bry).astype(jnp.float32)
        area_i = inter * valid
        area_a = (ax2 - ax1) * (ay2 - ay1)
        denom = jnp.maximum(area_a + area_b - area_i, 1e-9)  # guard padded boxes
        return area_i / denom

    o_anc_ref[...] = iou(anc_ref[...])
    o_roi_ref[...] = iou(roit_ref[...])


def pallas_pair_iou(anchors_t, rois_t, boxes):
    """anchors_t: (4, NAp) shared; rois_t: (n, 4, NRp) per image; boxes:
    (n, NBp, 4).  NAp/NRp are 128-multiples, NBp an 8-multiple, so both
    outputs are lane-dense (unmasked stores); results are cropped host-side."""
    n, nbp, _ = boxes.shape
    nap = anchors_t.shape[1]
    nrp = rois_t.shape[2]
    return pl.pallas_call(
        _pair_iou_kernel,
        grid=(n,),
        in_specs=[pl.BlockSpec(anchors_t.shape, lambda i: (0, 0)),
                  pl.BlockSpec((None, 4, nrp), lambda i: (i, 0, 0)),
                  pl.BlockSpec((None, nbp, 4), lambda i: (i, 0, 0))],
        out_specs=[pl.BlockSpec((None, nbp, nap), lambda i: (i, 0, 0)),
                   pl.BlockSpec((None, nbp, nrp), lambda i: (i, 0, 0))],
        out_shape=(jax.ShapeDtypeStruct((n, nbp, nap), jnp.float32),
                   jax.ShapeDtypeStruct((n, nbp, nrp), jnp.float32)),
        compiler_params=_cparams(1),
    )(anchors_t, rois_t, boxes)


def _losses_kernel(rpn_pred_ref, rpn_tgt_ref, rpn_lmask_ref, rpn_lbl_ref,
                   rpn_s0_ref, rpn_s1_ref,
                   roi_pred_ref, roi_tgt_ref, roi_lmask_ref,
                   roi_logits_ref, roi_ce_lbl_ref, roi_ce_w_ref,
                   o_ref, *, rpn_sigma2, roi_sigma2, n_class, score_lo, inv_n):

    def smooth_l1(pred, tgt, mask, sigma2):
        diff = jnp.abs(tgt - pred)
        elt = jnp.where(diff < (1.0 / sigma2),
                        0.5 * sigma2 * diff * diff,
                        diff - 0.5 / sigma2) * mask
        per_img = jnp.sum(elt, axis=-1, keepdims=True)                  # (n, 1)
        num_pos = jnp.maximum(jnp.sum(mask, axis=-1, keepdims=True) * 0.25, 1.0)
        return jnp.sum(per_img / num_pos, axis=0, keepdims=True)        # exact div

    rpn_loc = smooth_l1(rpn_pred_ref[...], rpn_tgt_ref[...],
                        rpn_lmask_ref[...], rpn_sigma2)
    roi_loc = smooth_l1(roi_pred_ref[...], roi_tgt_ref[...],
                        roi_lmask_ref[...], roi_sigma2)

    # RPN objectness cross-entropy (2 classes, ignore_index=-1), per-image mean.
    lbl = rpn_lbl_ref[...]
    s0 = rpn_s0_ref[...]
    s1 = rpn_s1_ref[...]
    mx = jnp.maximum(s0, s1)
    lse = mx + jnp.log(jnp.exp(s0 - mx) + jnp.exp(s1 - mx))
    sel = jnp.where(lbl > 0.5, s1, s0)
    valid = (lbl >= 0.0).astype(jnp.float32)
    nll = (lse - sel) * valid
    per_img = jnp.sum(nll, axis=-1, keepdims=True)
    cnt = jnp.maximum(jnp.sum(valid, axis=-1, keepdims=True), 1.0)
    rpn_cls = jnp.sum(per_img / cnt, axis=0, keepdims=True)

    # ROI cross-entropy: one lane-axis logsumexp over the 128-wide head output
    # (score logits live in lanes [score_lo, score_lo + n_class)); the labelled
    # logit is picked with an iota==label compare; per-image 1/count weights
    # (0 for padded rows) arrive precomputed so a single global sum remains.
    logits = roi_logits_ref[...]                                        # (nS, 128)
    lane = lax.broadcasted_iota(jnp.int32, logits.shape, 1)
    in_cls = jnp.logical_and(lane >= score_lo, lane < score_lo + n_class)
    masked = jnp.where(in_cls, logits, -1e30)
    mx2 = jnp.max(masked, axis=-1, keepdims=True)
    lse2 = mx2 + jnp.log(jnp.sum(jnp.exp(masked - mx2), axis=-1, keepdims=True))
    tgt_lane = roi_ce_lbl_ref[...].astype(jnp.int32) + score_lo         # (nS, 1)
    sel2 = jnp.sum(jnp.where(lane == tgt_lane, logits, 0.0),
                   axis=-1, keepdims=True)
    roi_cls = jnp.sum((lse2 - sel2) * roi_ce_w_ref[...],
                      axis=0, keepdims=True)

    vals = (rpn_loc * inv_n, rpn_cls * inv_n, roi_loc * inv_n, roi_cls * inv_n)
    total = vals[0] + vals[1] + vals[2] + vals[3]
    lane1 = lax.broadcasted_iota(jnp.int32, (1, LANE), 1)
    vec = jnp.zeros((1, LANE), jnp.float32)
    for idx, v in enumerate(vals + (total,)):
        vec = vec + jnp.where(lane1 == idx, v, 0.0)
    o_ref[...] = vec


def pallas_all_losses(rpn_pred, rpn_tgt, rpn_lmask, rpn_lbl, rpn_s0, rpn_s1,
                      roi_pred, roi_tgt, roi_lmask, roi_logits, roi_ce_lbl,
                      roi_ce_w, rpn_sigma, roi_sigma, n_class):
    n = rpn_pred.shape[0]
    kernel = functools.partial(
        _losses_kernel,
        rpn_sigma2=float(rpn_sigma) ** 2,
        roi_sigma2=float(roi_sigma) ** 2,
        n_class=int(n_class),
        score_lo=int(n_class) * 4,
        inv_n=1.0 / float(n))
    return pl.pallas_call(
        kernel,
        out_shape=jax.ShapeDtypeStruct((1, LANE), jnp.float32),
    )(rpn_pred, rpn_tgt, rpn_lmask, rpn_lbl, rpn_s0, rpn_s1,
      roi_pred, roi_tgt, roi_lmask, roi_logits, roi_ce_lbl, roi_ce_w)


# ------------------------- host-side numpy helpers --------------------------

def bbox2loc(src_bbox, dst_bbox):
    width = src_bbox[:, 2] - src_bbox[:, 0]
    height = src_bbox[:, 3] - src_bbox[:, 1]
    ctr_x = src_bbox[:, 0] + 0.5 * width
    ctr_y = src_bbox[:, 1] + 0.5 * height
    base_width = dst_bbox[:, 2] - dst_bbox[:, 0]
    base_height = dst_bbox[:, 3] - dst_bbox[:, 1]
    base_ctr_x = dst_bbox[:, 0] + 0.5 * base_width
    base_ctr_y = dst_bbox[:, 1] + 0.5 * base_height
    eps = np.finfo(height.dtype).eps
    width = np.maximum(width, eps)
    height = np.maximum(height, eps)
    dx = (base_ctr_x - ctr_x) / width
    dy = (base_ctr_y - ctr_y) / height
    dw = np.log(base_width / width)
    dh = np.log(base_height / height)
    return np.vstack((dx, dy, dw, dh)).transpose()


def box_iou(box_a, box_b):
    # numpy fallback (identical to the reference); the hot path uses the fused
    # Pallas pair-IoU kernel and passes the result in explicitly.
    if box_a.shape[1] != 4 or box_b.shape[1] != 4:
        raise IndexError
    tl = np.maximum(box_a[:, None, :2], box_b[:, :2])
    br = np.minimum(box_a[:, None, 2:], box_b[:, 2:])
    area_i = np.prod(br - tl, axis=2) * (tl < br).all(axis=2)
    area_a = np.prod(box_a[:, 2:] - box_a[:, :2], axis=1)
    area_b = np.prod(box_b[:, 2:] - box_b[:, :2], axis=1)
    return area_i / (area_a[:, None] + area_b - area_i)


class anchor_target_creator:
    def __init__(self, num_sample=256, pos_iou_thresh=0.7, neg_iou_thresh=0.3,
                 pos_ratio=0.5):
        self.num_sample = num_sample
        self.pos_iou_thresh = pos_iou_thresh
        self.neg_iou_thresh = neg_iou_thresh
        self.pos_ratio = pos_ratio

    def __call__(self, box, anchor, ious=None):
        argmax_iou, label = self._create_label(anchor, box, ious)
        if (label > 0).any():
            loc = bbox2loc(anchor, box[argmax_iou])
            return (loc, label)
        return (np.zeros_like(anchor), label)

    def _calc_ious(self, anchor, box, ious=None):
        if len(box) == 0:
            return (np.zeros(len(anchor), np.int32), np.zeros(len(anchor)),
                    np.zeros(len(box)))
        if ious is None:
            ious = box_iou(anchor, box)
        argmax_ious = ious.argmax(axis=1)
        max_ious = np.max(ious, axis=1)
        target_argmax_ious = ious.argmax(axis=0)
        for i in range(len(target_argmax_ious)):
            argmax_ious[target_argmax_ious[i]] = i
        return (argmax_ious, max_ious, target_argmax_ious)

    def _create_label(self, anchor, box, ious=None):
        label = np.empty((len(anchor),), dtype=np.int32)
        label.fill(-1)
        argmax_ious, max_ious, target_argmax_ious = self._calc_ious(anchor, box, ious)
        label[max_ious < self.neg_iou_thresh] = 0
        label[max_ious >= self.pos_iou_thresh] = 1
        if len(target_argmax_ious) > 0:
            label[target_argmax_ious] = 1
        num_pos = int(self.pos_ratio * self.num_sample)
        pos_index = np.where(label == 1)[0]
        if len(pos_index) > num_pos:
            give_up = np.random.choice(pos_index, size=len(pos_index) - num_pos,
                                       replace=False)
            label[give_up] = -1
        num_neg = self.num_sample - np.sum(label == 1)
        neg_index = np.where(label == 0)[0]
        if len(neg_index) > num_neg:
            give_up = np.random.choice(neg_index, size=len(neg_index) - num_neg,
                                       replace=False)
            label[give_up] = -1
        return (argmax_ious, label)


class proposal_target_creator:
    def __init__(self, n_sample=256, pos_ratio=0.25, pos_iou_thresh=0.5,
                 neg_iou_thresh_hi=0.5, neg_iou_thresh_lw=0.0):
        self.n_sample = n_sample
        self.pos_ratio = pos_ratio
        self.pos_iou_thresh = pos_iou_thresh
        self.neg_iou_thresh_hi = neg_iou_thresh_hi
        self.neg_iou_thresh_lw = neg_iou_thresh_lw
        self.pos_roi_image = np.round(n_sample * pos_ratio)

    def __call__(self, roi, bbox, label, loc_normalize_std=(0.1, 0.1, 0.2, 0.2),
                 iou=None):
        # TODO(synk): the original does roi.unsqueeze(0) before np.concatenate
        # (shape bug); here `roi` is already the (R+B, 4) concat of proposals + gt.
        roi = np.asarray(roi, np.float32)
        if iou is None:
            iou = box_iou(roi, bbox)
        if len(bbox) == 0:
            gt_assignment = np.zeros(len(roi), np.int32)
            max_iou = np.zeros(len(roi))
            gt_roi_label = np.zeros(len(roi))
        else:
            gt_assignment = iou.argmax(axis=1)
            max_iou = iou.max(axis=1)
            gt_roi_label = label[gt_assignment] + 1
        pos_index = np.where(max_iou >= self.pos_iou_thresh)[0]
        pos_roi_per_this_image = int(min(self.pos_roi_image, pos_index.size))
        if pos_index.size > 0:
            pos_index = np.random.choice(pos_index, size=pos_roi_per_this_image,
                                         replace=False)
        neg_index = np.where((max_iou < self.neg_iou_thresh_hi)
                             & (max_iou >= self.neg_iou_thresh_lw))[0]
        neg_roi_per_this_image = self.n_sample - pos_roi_per_this_image
        neg_roi_per_this_image = int(min(neg_roi_per_this_image, neg_index.size))
        if neg_index.size > 0:
            neg_index = np.random.choice(neg_index, size=neg_roi_per_this_image,
                                         replace=False)
        keep_index = np.append(pos_index, neg_index)
        sample_roi = roi[keep_index]
        if len(bbox) == 0:
            return (sample_roi, np.zeros_like(sample_roi), gt_roi_label[keep_index])
        gt_roi_loc = bbox2loc(sample_roi, bbox[gt_assignment[keep_index]])
        gt_roi_loc = gt_roi_loc / np.array(loc_normalize_std, np.float32)
        gt_roi_label = gt_roi_label[keep_index]
        gt_roi_label[pos_roi_per_this_image:] = 0
        return (sample_roi, gt_roi_loc, gt_roi_label)


# ---------------------- synthetic Faster-RCNN "model" -----------------------

class SyntheticFasterRCNN:
    """Tiny deterministic stand-in for backbone / RPN / head.  All channel and
    head widths are zero-padded to 128 lanes; the padded columns stay exactly
    zero through the ReLU chains, so semantics match the unpadded model."""

    def __init__(self, key, c_in=4, c_feat=32, n_anchor=3, n_class=3,
                 hidden=32, stride=4, anchor_sizes=(4.0, 8.0, 12.0), n_rois=16):
        self.c_in, self.c_feat = c_in, c_feat
        self.n_anchor, self.n_class = n_anchor, n_class
        self.hidden, self.stride = hidden, stride
        self.anchor_sizes, self.n_rois = anchor_sizes, n_rois
        self.c_pad = LANE
        self.h_pad = LANE
        self.o_pad = LANE
        self._anchor_cache = {}

        ks = jax.random.split(key, 7)

        def init(k, shape):
            return jax.random.normal(k, shape, jnp.float32) * 0.05

        def z(shape):
            return jnp.zeros(shape, jnp.float32)

        # extractor 1x1 conv (kept f32: it runs as VPU FMAs, K = c_in)
        self.w_ext = z((c_in, self.c_pad)).at[:, :c_feat].set(
            init(ks[0], (c_in, c_feat)))
        self.b_ext = z((1, self.c_pad))

        # RPN conv + fused loc|score heads (bf16 for the MXU)
        w_rpn = z((self.c_pad, self.c_pad)).at[:c_feat, :c_feat].set(
            init(ks[1], (c_feat, c_feat)))
        self.w_rpn_bf = w_rpn.astype(jnp.bfloat16)
        self.b_rpn = z((1, self.c_pad))
        w_rpn_hd = z((self.c_pad, self.o_pad))
        w_rpn_hd = w_rpn_hd.at[:c_feat, :n_anchor * 4].set(
            init(ks[2], (c_feat, n_anchor * 4)))
        w_rpn_hd = w_rpn_hd.at[:c_feat, n_anchor * 4:n_anchor * 6].set(
            init(ks[3], (c_feat, n_anchor * 2)))
        self.w_rpn_hd_bf = w_rpn_hd.astype(jnp.bfloat16)
        self.b_rpn_hd = z((1, self.o_pad))

        # head FC split into a per-image (pooled-feature) part and a per-ROI
        # (4-coordinate) part so the kernel contraction stays at 128 lanes.
        w_fc_real = init(ks[4], (c_feat + 4, hidden))
        self.w_fc_feat = z((self.c_pad, self.h_pad)).at[:c_feat, :hidden].set(
            w_fc_real[:c_feat])                       # f32, tiny per-image GEMM
        self.w_fc_roi = z((4, self.h_pad)).at[:, :hidden].set(w_fc_real[c_feat:])
        self.b_fc = z((1, self.h_pad))
        w_cls = z((self.h_pad, self.o_pad))
        w_cls = w_cls.at[:hidden, :n_class * 4].set(init(ks[5], (hidden, n_class * 4)))
        w_cls = w_cls.at[:hidden, n_class * 4:n_class * 5].set(
            init(ks[6], (hidden, n_class)))
        self.w_cls_bf = w_cls.astype(jnp.bfloat16)
        self.b_cls = z((1, self.o_pad))

    def anchors_for(self, hf, wf):
        # anchors are recomputed only once per (Hf, Wf).
        key = (hf, wf)
        if key not in self._anchor_cache:
            s = self.stride
            ys, xs = np.meshgrid(np.arange(hf), np.arange(wf), indexing='ij')
            cx = (xs.reshape(-1) + 0.5) * s
            cy = (ys.reshape(-1) + 0.5) * s
            per_size = []
            for size in self.anchor_sizes:
                h = size / 2.0
                per_size.append(np.stack([cx - h, cy - h, cx + h, cy + h], axis=-1))
            self._anchor_cache[key] = np.stack(per_size, axis=1).reshape(
                -1, 4).astype(np.float32)
        return self._anchor_cache[key]

    @staticmethod
    def _loc2bbox(anchors, locs):
        w = anchors[:, 2] - anchors[:, 0]
        h = anchors[:, 3] - anchors[:, 1]
        cx = anchors[:, 0] + 0.5 * w
        cy = anchors[:, 1] + 0.5 * h
        dx, dy, dw, dh = locs[..., 0], locs[..., 1], locs[..., 2], locs[..., 3]
        ncx = dx * w + cx
        ncy = dy * h + cy
        nw = jnp.exp(dw) * w
        nh = jnp.exp(dh) * h
        return jnp.stack([ncx - 0.5 * nw, ncy - 0.5 * nh,
                          ncx + 0.5 * nw, ncy + 0.5 * nh], axis=-1)

    # extractor (avg-pool stride-s glue + 1x1 conv) + RPN convs fused in one kernel
    def extract_and_rpn(self, images):
        n, C, H, W = images.shape
        s = self.stride
        Hf, Wf = H // s, W // s
        # TODO(synk): the stride-s average pool + NCHW->NHWC transpose stay in
        # XLA: fusing them into the kernel needs a gather-style input BlockSpec
        # that a rectangular index_map cannot express.
        pooled = images.reshape(n, C, Hf, s, Wf, s).mean(axis=(3, 5))
        x = jnp.transpose(pooled, (0, 2, 3, 1)).reshape(n * Hf * Wf, C)
        feat_flat, rpn_out = pallas_ext_rpn(
            x, self.w_ext, self.b_ext, self.w_rpn_bf, self.b_rpn,
            self.w_rpn_hd_bf, self.b_rpn_hd)
        A = Hf * Wf * self.n_anchor
        rpn_locs = rpn_out[:, :self.n_anchor * 4].reshape(n, A, 4)
        rpn_scores = rpn_out[:, self.n_anchor * 4:self.n_anchor * 6].reshape(n, A, 2)
        anchors = jnp.asarray(self.anchors_for(Hf, Wf))
        fg = jax.nn.softmax(rpn_scores, axis=-1)[..., 1]
        decoded = self._loc2bbox(anchors, rpn_locs)
        decoded = jnp.stack([
            jnp.clip(decoded[..., 0], 0.0, float(W)),
            jnp.clip(decoded[..., 1], 0.0, float(H)),
            jnp.clip(decoded[..., 2], 0.0, float(W)),
            jnp.clip(decoded[..., 3], 0.0, float(H))], axis=-1)
        # TODO(synk): NMS-based proposal filtering has no clean Pallas equivalent;
        # use a deterministic fixed-size top-k by objectness instead.
        _, top_idx = jax.lax.top_k(fg, self.n_rois)
        rois = jax.vmap(lambda d, i: d[i])(decoded, top_idx)     # (n, R, 4)
        # TODO(synk): RoIAlign is a data-dependent gather; approximated by a
        # per-image global average pool over the (bf16) feature map.
        pooled_feat = feat_flat.reshape(n, Hf * Wf, -1).astype(
            jnp.float32).mean(axis=1)                            # (n, C_pad)
        return pooled_feat, rpn_locs, rpn_scores, rois

    # head: per-image pooled contribution (tiny XLA GEMM) + fused ROI-FMA /
    # classifier kernel producing [cls_locs | scores | zeros] per ROI.
    def head(self, pooled_feat, roi_norm):
        h_img = jnp.dot(pooled_feat, self.w_fc_feat,
                        preferred_element_type=jnp.float32)      # (n, h_pad)
        return pallas_head(h_img, roi_norm, self.w_fc_roi, self.b_fc,
                           self.w_cls_bf, self.b_cls)            # (n, S, o_pad)


# ------------------------- Faster_RCNN_training ------------------------------

class FasterRCNNTraining:
    def __init__(self, model):
        self.model = model
        self.rpn_sigma = 1
        self.roi_sigma = 1
        self.anchor_target_creator = anchor_target_creator()
        self.proposal_target_creator = proposal_target_creator()
        self.std = [0.1, 0.1, 0.2, 0.2]
        self._stage1 = jax.jit(self._stage1_impl)
        self._stage2 = jax.jit(self._stage2_impl)

    # ---- device work before the host sampling step (one compiled program) ----
    def _stage1_impl(self, images, boxes_dev):
        pooled_feat, rpn_locs, rpn_scores, rois = self.model.extract_and_rpn(images)
        rois_all = jnp.concatenate([rois, boxes_dev], axis=1)     # (n, R+B, 4)
        hf = images.shape[2] // self.model.stride
        wf = images.shape[3] // self.model.stride
        anchors_np = self.model.anchors_for(hf, wf)
        a = anchors_np.shape[0]
        na_pad = -(-a // LANE) * LANE
        anc_t = np.zeros((4, na_pad), np.float32)
        anc_t[:, :a] = anchors_np.T
        nr = rois_all.shape[1]
        nr_pad = -(-nr // LANE) * LANE
        rois_t = jnp.transpose(
            jnp.pad(rois_all, ((0, 0), (0, nr_pad - nr), (0, 0))), (0, 2, 1))
        nb = boxes_dev.shape[1]
        nb_pad = max(8, -(-nb // 8) * 8)
        boxes_p = jnp.pad(boxes_dev, ((0, 0), (0, nb_pad - nb), (0, 0)))
        anchor_iou, roi_iou = pallas_pair_iou(jnp.asarray(anc_t), rois_t, boxes_p)
        return pooled_feat, rpn_locs, rpn_scores, rois_all, anchor_iou, roi_iou

    # ---- device work after the host sampling step (one compiled program) ----
    def _stage2_impl(self, pooled_feat, rpn_locs, rpn_scores, roi_norm,
                     t_rpn_loc, rpn_lbl, rpn_lmask,
                     t_roi_loc, roi_lbl, roi_lmask, roi_ce_lbl, roi_ce_w):
        n, s_pad = roi_norm.shape[0], roi_norm.shape[1]
        n_class = self.model.n_class
        a = rpn_locs.shape[1]
        head_out = self.model.head(pooled_feat, roi_norm)        # (n, S, o_pad)
        cls_locs = head_out[:, :, :n_class * 4].reshape(n, s_pad, n_class, 4)
        roi_lbl_i = roi_lbl.astype(jnp.int32)
        roi_loc_pred = jnp.zeros((n, s_pad, 4), jnp.float32)
        for c in range(n_class):
            roi_loc_pred = roi_loc_pred + jnp.where(
                (roi_lbl_i == c)[:, :, None], cls_locs[:, :, c, :], 0.0)
        roi_logits = head_out.reshape(n * s_pad, head_out.shape[-1])
        return pallas_all_losses(
            rpn_locs.reshape(n, a * 4), t_rpn_loc, rpn_lmask, rpn_lbl,
            rpn_scores[..., 0], rpn_scores[..., 1],
            roi_loc_pred.reshape(n, s_pad * 4), t_roi_loc, roi_lmask,
            roi_logits, roi_ce_lbl, roi_ce_w,
            self.rpn_sigma, self.roi_sigma, n_class)

    def forward(self, images, box, labels, scales):
        n = int(images.shape[0])
        H, W = int(images.shape[2]), int(images.shape[3])
        boxes_np = np.asarray(box, np.float32)
        labels_np = np.asarray(labels)
        boxes_dev = jnp.asarray(boxes_np)

        (pooled_feat, rpn_locs, rpn_scores, rois_all,
         anchor_iou_p, roi_iou_p) = self._stage1(images, boxes_dev)

        hf, wf = H // self.model.stride, W // self.model.stride
        anchors_np = self.model.anchors_for(hf, wf)
        a = anchors_np.shape[0]

        # single device->host sync: the sampling logic below is numpy/np.random;
        # padded IoU matrices are cropped host-side.
        rois_all_np, anchor_iou_np, roi_iou_np = jax.device_get(
            (rois_all, anchor_iou_p, roi_iou_p))
        nb = boxes_np.shape[1]
        nr = rois_all_np.shape[1]
        anchor_iou_np = anchor_iou_np[:, :nb, :a]
        roi_iou_np = roi_iou_np[:, :nb, :nr]

        target_rpn_locs = np.zeros((n, a, 4), np.float32)
        target_rpn_labels = np.full((n, a), -1, np.int32)
        s_rois, t_locs, t_lbls = [], [], []
        for i in range(n):
            t_loc, t_lbl = self.anchor_target_creator(
                boxes_np[i], anchors_np, ious=anchor_iou_np[i].T)
            target_rpn_locs[i] = t_loc
            target_rpn_labels[i] = t_lbl
            sample_roi, t_roi_loc, t_roi_lbl = self.proposal_target_creator(
                rois_all_np[i], boxes_np[i], labels_np[i], self.std,
                iou=roi_iou_np[i].T)
            s_rois.append(np.asarray(sample_roi, np.float32))
            t_locs.append(np.asarray(t_roi_loc, np.float32))
            t_lbls.append(np.asarray(t_roi_lbl).astype(np.int32))

        counts = [r.shape[0] for r in s_rois]
        s_pad = max(16, int(-(-max(counts) // 16) * 16))
        samples_rois = np.zeros((n, s_pad, 4), np.float32)
        target_roi_locs = np.zeros((n, s_pad, 4), np.float32)
        target_roi_labels = np.full((n, s_pad), -1, np.int32)   # -1 = padded row
        for i in range(n):
            c = counts[i]
            if c:
                samples_rois[i, :c] = s_rois[i]
                target_roi_locs[i, :c] = t_locs[i]
                target_roi_labels[i, :c] = t_lbls[i]

        # normalized ROI coords are the only per-ROI head input.
        roi_norm = samples_rois / np.array([W, H, W, H], np.float32)

        rpn_lmask = np.repeat((target_rpn_labels > 0).astype(np.float32), 4, axis=1)
        roi_lmask = np.repeat((target_roi_labels > 0).astype(np.float32), 4, axis=1)

        # per-row ROI cross-entropy weights: 1/count for valid rows, 0 for pad.
        cnts = np.maximum(np.asarray(counts, np.float32), 1.0)
        roi_ce_lbl = target_roi_labels.astype(np.float32).reshape(n * s_pad, 1)
        roi_ce_w = (np.where(target_roi_labels >= 0, 1.0, 0.0)
                    / cnts[:, None]).reshape(n * s_pad, 1).astype(np.float32)

        out = self._stage2(
            pooled_feat, rpn_locs, rpn_scores,
            jnp.asarray(roi_norm),
            jnp.asarray(target_rpn_locs.reshape(n, a * 4)),
            jnp.asarray(target_rpn_labels.astype(np.float32)),
            jnp.asarray(rpn_lmask),
            jnp.asarray(target_roi_locs.reshape(n, s_pad * 4)),
            jnp.asarray(target_roi_labels.astype(np.float32)),
            jnp.asarray(roi_lmask),
            jnp.asarray(roi_ce_lbl),
            jnp.asarray(roi_ce_w))

        losses = [out[0, 0], out[0, 1], out[0, 2], out[0, 3], out[0, 4]]
        return losses


# ----------------------------------- main ------------------------------------

if __name__ == "__main__":
    np.random.seed(0)
    key = jax.random.PRNGKey(0)
    k_img, k_model = jax.random.split(key)

    n, C, H, W = 2, 4, 16, 16
    images = jax.random.normal(k_img, (n, C, H, W), jnp.float32)
    boxes = np.array([
        [[1.0, 1.0, 9.0, 9.0], [6.0, 6.0, 14.0, 14.0], [2.0, 8.0, 10.0, 15.0]],
        [[0.0, 0.0, 8.0, 8.0], [4.0, 5.0, 12.0, 13.0], [8.0, 2.0, 15.0, 9.0]],
    ], np.float32)
    labels = np.array([[0, 1, 1], [1, 0, 0]], np.int32)
    scales = np.ones((n,), np.float32)

    model = SyntheticFasterRCNN(k_model, c_in=C)
    trainer = FasterRCNNTraining(model)

    losses = trainer.forward(images, boxes, labels, scales)
    total = jax.block_until_ready(losses[-1])
    assert np.isfinite(float(total)), "non-finite total loss"
    print("KERNEL_OK")
</pallas_src>

<mosaic_0001>
module attributes {stable_mosaic.version = 11 : i64} {
  func.func @_ext_rpn_kernel(%arg0: i32, %arg1: memref<16x4xf32, #tpu.memory_space<vmem>>, %arg2: memref<4x128xf32, #tpu.memory_space<vmem>>, %arg3: memref<1x128xf32, #tpu.memory_space<vmem>>, %arg4: memref<128x128xbf16, #tpu.memory_space<vmem>>, %arg5: memref<1x128xf32, #tpu.memory_space<vmem>>, %arg6: memref<128x128xbf16, #tpu.memory_space<vmem>>, %arg7: memref<1x128xf32, #tpu.memory_space<vmem>>, %arg8: memref<16x128xbf16, #tpu.memory_space<vmem>>, %arg9: memref<16x128xf32, #tpu.memory_space<vmem>>) attributes {dimension_semantics = [#tpu.dimension_semantics<parallel>], iteration_bounds = array<i64: 2>, scalar_prefetch = 0 : i64, scratch_operands = 0 : i64, tpu.core_type = #tpu.core_type<tc>, window_params = [{transform_indices = @transform_0, window_bounds = array<i64: 16, 4>}, {pipeline_mode = #tpu.pipeline_mode<synchronous>, transform_indices = @transform_1, window_bounds = array<i64: 4, 128>}, {pipeline_mode = #tpu.pipeline_mode<synchronous>, transform_indices = @transform_2, window_bounds = array<i64: 1, 128>}, {pipeline_mode = #tpu.pipeline_mode<synchronous>, transform_indices = @transform_3, window_bounds = array<i64: 128, 128>}, {pipeline_mode = #tpu.pipeline_mode<synchronous>, transform_indices = @transform_4, window_bounds = array<i64: 1, 128>}, {pipeline_mode = #tpu.pipeline_mode<synchronous>, transform_indices = @transform_5, window_bounds = array<i64: 128, 128>}, {pipeline_mode = #tpu.pipeline_mode<synchronous>, transform_indices = @transform_6, window_bounds = array<i64: 1, 128>}, {transform_indices = @transform_7, window_bounds = array<i64: 16, 128>}, {transform_indices = @transform_8, window_bounds = array<i64: 16, 128>}]} {
    %c0 = arith.constant 0 : index
    %c0_0 = arith.constant 0 : index
    %0 = vector.load %arg1[%c0, %c0_0] : memref<16x4xf32, #tpu.memory_space<vmem>>, vector<16x4xf32>
    %c0_1 = arith.constant 0 : index
    %c0_2 = arith.constant 0 : index
    %1 = vector.load %arg2[%c0_1, %c0_2] : memref<4x128xf32, #tpu.memory_space<vmem>>, vector<4x128xf32>
    %2 = vector.extract_strided_slice %0 {offsets = [0, 0], sizes = [16, 1], strides = [1, 1]} : vector<16x4xf32> to vector<16x1xf32>
    %3 = vector.extract_strided_slice %1 {offsets = [0, 0], sizes = [1, 128], strides = [1, 1]} : vector<4x128xf32> to vector<1x128xf32>
    %4 = vector.broadcast %2 : vector<16x1xf32> to vector<16x128xf32>
    %5 = vector.broadcast %3 : vector<1x128xf32> to vector<16x128xf32>
    %6 = arith.mulf %4, %5 : vector<16x128xf32>
    %7 = vector.extract_strided_slice %0 {offsets = [0, 1], sizes = [16, 1], strides = [1, 1]} : vector<16x4xf32> to vector<16x1xf32>
    %8 = vector.extract_strided_slice %1 {offsets = [1, 0], sizes = [1, 128], strides = [1, 1]} : vector<4x128xf32> to vector<1x128xf32>
    %9 = vector.broadcast %7 : vector<16x1xf32> to vector<16x128xf32>
    %10 = vector.broadcast %8 : vector<1x128xf32> to vector<16x128xf32>
    %11 = arith.mulf %9, %10 : vector<16x128xf32>
    %12 = arith.addf %6, %11 : vector<16x128xf32>
    %13 = vector.extract_strided_slice %0 {offsets = [0, 2], sizes = [16, 1], strides = [1, 1]} : vector<16x4xf32> to vector<16x1xf32>
    %14 = vector.extract_strided_slice %1 {offsets = [2, 0], sizes = [1, 128], strides = [1, 1]} : vector<4x128xf32> to vector<1x128xf32>
    %15 = vector.broadcast %13 : vector<16x1xf32> to vector<16x128xf32>
    %16 = vector.broadcast %14 : vector<1x128xf32> to vector<16x128xf32>
    %17 = arith.mulf %15, %16 : vector<16x128xf32>
    %18 = arith.addf %12, %17 : vector<16x128xf32>
    %19 = vector.extract_strided_slice %0 {offsets = [0, 3], sizes = [16, 1], strides = [1, 1]} : vector<16x4xf32> to vector<16x1xf32>
    %20 = vector.extract_strided_slice %1 {offsets = [3, 0], sizes = [1, 128], strides = [1, 1]} : vector<4x128xf32> to vector<1x128xf32>
    %21 = vector.broadcast %19 : vector<16x1xf32> to vector<16x128xf32>
    %22 = vector.broadcast %20 : vector<1x128xf32> to vector<16x128xf32>
    %23 = arith.mulf %21, %22 : vector<16x128xf32>
    %24 = arith.addf %18, %23 : vector<16x128xf32>
    %c0_3 = arith.constant 0 : index
    %c0_4 = arith.constant 0 : index
    %25 = vector.load %arg3[%c0_3, %c0_4] : memref<1x128xf32, #tpu.memory_space<vmem>>, vector<1x128xf32>
    %26 = vector.broadcast %25 : vector<1x128xf32> to vector<16x128xf32>
    %27 = arith.addf %24, %26 : vector<16x128xf32>
    %cst = arith.constant 0.000000e+00 : f32
    %28 = vector.broadcast %cst : f32 to vector<16x128xf32>
    %29 = arith.maximumf %27, %28 : vector<16x128xf32>
    %30 = arith.truncf %29 : vector<16x128xf32> to vector<16x128xbf16>
    %c0_5 = arith.constant 0 : index
    %c0_6 = arith.constant 0 : index
    %31 = vector.load %arg8[%c0_5, %c0_6] : memref<16x128xbf16, #tpu.memory_space<vmem>>, vector<16x128xbf16>
    tpu.vector_store %arg8[%c0_5, %c0_6], %30 {strides = array<i32>} : memref<16x128xbf16, #tpu.memory_space<vmem>>, vector<16x128xbf16>,
    %c0_7 = arith.constant 0 : index
    %c0_8 = arith.constant 0 : index
    %32 = vector.load %arg4[%c0_7, %c0_8] : memref<128x128xbf16, #tpu.memory_space<vmem>>, vector<128x128xbf16>
    %cst_9 = arith.constant dense<0.000000e+00> : vector<16x128xf32>
    %33 = tpu.matmul %30, %32, %cst_9 {dimension_numbers = #tpu.dot_dimension_numbers<[1], [0], [0], [1], [0, 0, 1, 1], [], []>} : vector<16x128xbf16>, vector<128x128xbf16>, vector<16x128xf32> -> vector<16x128xf32>
    %c0_10 = arith.constant 0 : index
    %c0_11 = arith.constant 0 : index
    %34 = vector.load %arg5[%c0_10, %c0_11] : memref<1x128xf32, #tpu.memory_space<vmem>>, vector<1x128xf32>
    %35 = vector.broadcast %34 : vector<1x128xf32> to vector<16x128xf32>
    %36 = arith.addf %33, %35 : vector<16x128xf32>
    %cst_12 = arith.constant 0.000000e+00 : f32
    %37 = vector.broadcast %cst_12 : f32 to vector<16x128xf32>
    %38 = arith.maximumf %36, %37 : vector<16x128xf32>
    %39 = arith.truncf %38 : vector<16x128xf32> to vector<16x128xbf16>
    %c0_13 = arith.constant 0 : index
    %c0_14 = arith.constant 0 : index
    %40 = vector.load %arg6[%c0_13, %c0_14] : memref<128x128xbf16, #tpu.memory_space<vmem>>, vector<128x128xbf16>
    %cst_15 = arith.constant dense<0.000000e+00> : vector<16x128xf32>
    %41 = tpu.matmul %39, %40, %cst_15 {dimension_numbers = #tpu.dot_dimension_numbers<[1], [0], [0], [1], [0, 0, 1, 1], [], []>} : vector<16x128xbf16>, vector<128x128xbf16>, vector<16x128xf32> -> vector<16x128xf32>
    %c0_16 = arith.constant 0 : index
    %c0_17 = arith.constant 0 : index
    %42 = vector.load %arg7[%c0_16, %c0_17] : memref<1x128xf32, #tpu.memory_space<vmem>>, vector<1x128xf32>
    %43 = vector.broadcast %42 : vector<1x128xf32> to vector<16x128xf32>
    %44 = arith.addf %41, %43 : vector<16x128xf32>
    %c0_18 = arith.constant 0 : index
    %c0_19 = arith.constant 0 : index
    %45 = vector.load %arg9[%c0_18, %c0_19] : memref<16x128xf32, #tpu.memory_space<vmem>>, vector<16x128xf32>
    tpu.vector_store %arg9[%c0_18, %c0_19], %44 {strides = array<i32>} : memref<16x128xf32, #tpu.memory_space<vmem>>, vector<16x128xf32>,
    return
  }
  func.func @transform_0(%arg0: i32) -> (i32, i32) {
    %c0_i32 = arith.constant 0 : i32
    %c0_i32_0 = arith.constant 0 : i32
    return %arg0, %c0_i32 : i32, i32
  }
  func.func @transform_1(%arg0: i32) -> (i32, i32) {
    %c0_i32 = arith.constant 0 : i32
    %c0_i32_0 = arith.constant 0 : i32
    %c0_i32_1 = arith.constant 0 : i32
    return %c0_i32, %c0_i32_0 : i32, i32
  }
  func.func @transform_2(%arg0: i32) -> (i32, i32) {
    %c0_i32 = arith.constant 0 : i32
    %c0_i32_0 = arith.constant 0 : i32
    %c0_i32_1 = arith.constant 0 : i32
    return %c0_i32, %c0_i32_0 : i32, i32
  }
  func.func @transform_3(%arg0: i32) -> (i32, i32) {
    %c0_i32 = arith.constant 0 : i32
    %c0_i32_0 = arith.constant 0 : i32
    %c0_i32_1 = arith.constant 0 : i32
    return %c0_i32, %c0_i32_0 : i32, i32
  }
  func.func @transform_4(%arg0: i32) -> (i32, i32) {
    %c0_i32 = arith.constant 0 : i32
    %c0_i32_0 = arith.constant 0 : i32
    %c0_i32_1 = arith.constant 0 : i32
    return %c0_i32, %c0_i32_0 : i32, i32
  }
  func.func @transform_5(%arg0: i32) -> (i32, i32) {
    %c0_i32 = arith.constant 0 : i32
    %c0_i32_0 = arith.constant 0 : i32
    %c0_i32_1 = arith.constant 0 : i32
    return %c0_i32, %c0_i32_0 : i32, i32
  }
  func.func @transform_6(%arg0: i32) -> (i32, i32) {
    %c0_i32 = arith.constant 0 : i32
    %c0_i32_0 = arith.constant 0 : i32
    %c0_i32_1 = arith.constant 0 : i32
    return %c0_i32, %c0_i32_0 : i32, i32
  }
  func.func @transform_7(%arg0: i32) -> (i32, i32) {
    %c0_i32 = arith.constant 0 : i32
    %c0_i32_0 = arith.constant 0 : i32
    return %arg0, %c0_i32 : i32, i32
  }
  func.func @transform_8(%arg0: i32) -> (i32, i32) {
    %c0_i32 = arith.constant 0 : i32
    %c0_i32_0 = arith.constant 0 : i32
    return %arg0, %c0_i32 : i32, i32
  }
}

module attributes {stable_mosaic.version = 11 : i64} {
  func.func @_pair_iou_kernel(%arg0: i32, %arg1: memref<4x128xf32, #tpu.memory_space<vmem>>, %arg2: memref<1x4x128xf32, #tpu.memory_space<vmem>>, %arg3: memref<1x8x4xf32, #tpu.memory_space<vmem>>, %arg4: memref<1x8x128xf32, #tpu.memory_space<vmem>>, %arg5: memref<1x8x128xf32, #tpu.memory_space<vmem>>) attributes {dimension_semantics = [#tpu.dimension_semantics<parallel>], iteration_bounds = array<i64: 2>, scalar_prefetch = 0 : i64, scratch_operands = 0 : i64, tpu.core_type = #tpu.core_type<tc>, window_params = [{pipeline_mode = #tpu.pipeline_mode<synchronous>, transform_indices = @transform_0, window_bounds = array<i64: 4, 128>}, {transform_indices = @transform_1, window_bounds = array<i64: 1, 4, 128>}, {transform_indices = @transform_2, window_bounds = array<i64: 1, 8, 4>}, {transform_indices = @transform_3, window_bounds = array<i64: 1, 8, 128>}, {transform_indices = @transform_4, window_bounds = array<i64: 1, 8, 128>}]} {
    %c0 = arith.constant 0 : index
    %c0_0 = arith.constant 0 : index
    %c0_1 = arith.constant 0 : index
    %0 = vector.load %arg3[%c0, %c0_0, %c0_1] : memref<1x8x4xf32, #tpu.memory_space<vmem>>, vector<1x8x4xf32>
    %1 = vector.shape_cast %0 : vector<1x8x4xf32> to vector<8x4xf32>
    %2 = vector.extract_strided_slice %1 {offsets = [0, 0], sizes = [8, 1], strides = [1, 1]} : vector<8x4xf32> to vector<8x1xf32>
    %3 = vector.extract_strided_slice %1 {offsets = [0, 1], sizes = [8, 1], strides = [1, 1]} : vector<8x4xf32> to vector<8x1xf32>
    %4 = vector.extract_strided_slice %1 {offsets = [0, 2], sizes = [8, 1], strides = [1, 1]} : vector<8x4xf32> to vector<8x1xf32>
    %5 = vector.extract_strided_slice %1 {offsets = [0, 3], sizes = [8, 1], strides = [1, 1]} : vector<8x4xf32> to vector<8x1xf32>
    %6 = arith.subf %4, %2 : vector<8x1xf32>
    %7 = arith.subf %5, %3 : vector<8x1xf32>
    %8 = arith.mulf %6, %7 : vector<8x1xf32>
    %c0_2 = arith.constant 0 : index
    %c0_3 = arith.constant 0 : index
    %9 = vector.load %arg1[%c0_2, %c0_3] : memref<4x128xf32, #tpu.memory_space<vmem>>, vector<4x128xf32>
    %10 = vector.extract_strided_slice %9 {offsets = [0, 0], sizes = [1, 128], strides = [1, 1]} : vector<4x128xf32> to vector<1x128xf32>
    %11 = vector.extract_strided_slice %9 {offsets = [1, 0], sizes = [1, 128], strides = [1, 1]} : vector<4x128xf32> to vector<1x128xf32>
    %12 = vector.extract_strided_slice %9 {offsets = [2, 0], sizes = [1, 128], strides = [1, 1]} : vector<4x128xf32> to vector<1x128xf32>
    %13 = vector.extract_strided_slice %9 {offsets = [3, 0], sizes = [1, 128], strides = [1, 1]} : vector<4x128xf32> to vector<1x128xf32>
    %14 = vector.broadcast %10 : vector<1x128xf32> to vector<8x128xf32>
    %15 = vector.broadcast %2 : vector<8x1xf32> to vector<8x128xf32>
    %16 = arith.maximumf %14, %15 : vector<8x128xf32>
    %17 = vector.broadcast %11 : vector<1x128xf32> to vector<8x128xf32>
    %18 = vector.broadcast %3 : vector<8x1xf32> to vector<8x128xf32>
    %19 = arith.maximumf %17, %18 : vector<8x128xf32>
    %20 = vector.broadcast %12 : vector<1x128xf32> to vector<8x128xf32>
    %21 = vector.broadcast %4 : vector<8x1xf32> to vector<8x128xf32>
    %22 = arith.minimumf %20, %21 : vector<8x128xf32>
    %23 = vector.broadcast %13 : vector<1x128xf32> to vector<8x128xf32>
    %24 = vector.broadcast %5 : vector<8x1xf32> to vector<8x128xf32>
    %25 = arith.minimumf %23, %24 : vector<8x128xf32>
    %26 = arith.subf %22, %16 : vector<8x128xf32>
    %27 = arith.subf %25, %19 : vector<8x128xf32>
    %28 = arith.mulf %26, %27 : vector<8x128xf32>
    %29 = arith.cmpf olt, %16, %22 : vector<8x128xf32>
    %30 = arith.cmpf olt, %19, %25 : vector<8x128xf32>
    %31 = arith.andi %29, %30 : vector<8x128xi1>
    %32 = arith.extui %31 : vector<8x128xi1> to vector<8x128xi32>
    %33 = arith.sitofp %32 : vector<8x128xi32> to vector<8x128xf32>
    %34 = arith.mulf %28, %33 : vector<8x128xf32>
    %35 = arith.subf %12, %10 : vector<1x128xf32>
    %36 = arith.subf %13, %11 : vector<1x128xf32>
    %37 = arith.mulf %35, %36 : vector<1x128xf32>
    %38 = vector.broadcast %37 : vector<1x128xf32> to vector<8x128xf32>
    %39 = vector.broadcast %8 : vector<8x1xf32> to vector<8x128xf32>
    %40 = arith.addf %38, %39 : vector<8x128xf32>
    %41 = arith.subf %40, %34 : vector<8x128xf32>
    %cst = arith.constant 9.99999971E-10 : f32
    %42 = vector.broadcast %cst : f32 to vector<8x128xf32>
    %43 = arith.maximumf %41, %42 : vector<8x128xf32>
    %44 = arith.divf %34, %43 : vector<8x128xf32>
    %c0_4 = arith.constant 0 : index
    %c0_5 = arith.constant 0 : index
    %c0_6 = arith.constant 0 : index
    %45 = vector.load %arg4[%c0_4, %c0_5, %c0_6] : memref<1x8x128xf32, #tpu.memory_space<vmem>>, vector<1x8x128xf32>
    %46 = vector.shape_cast %45 : vector<1x8x128xf32> to vector<8x128xf32>
    %47 = vector.shape_cast %44 : vector<8x128xf32> to vector<1x8x128xf32>
    tpu.vector_store %arg4[%c0_4, %c0_5, %c0_6], %47 {strides = array<i32>} : memref<1x8x128xf32, #tpu.memory_space<vmem>>, vector<1x8x128xf32>,
    %c0_7 = arith.constant 0 : index
    %c0_8 = arith.constant 0 : index
    %c0_9 = arith.constant 0 : index
    %48 = vector.load %arg2[%c0_7, %c0_8, %c0_9] : memref<1x4x128xf32, #tpu.memory_space<vmem>>, vector<1x4x128xf32>
    %49 = vector.shape_cast %48 : vector<1x4x128xf32> to vector<4x128xf32>
    %50 = vector.extract_strided_slice %49 {offsets = [0, 0], sizes = [1, 128], strides = [1, 1]} : vector<4x128xf32> to vector<1x128xf32>
    %51 = vector.extract_strided_slice %49 {offsets = [1, 0], sizes = [1, 128], strides = [1, 1]} : vector<4x128xf32> to vector<1x128xf32>
    %52 = vector.extract_strided_slice %49 {offsets = [2, 0], sizes = [1, 128], strides = [1, 1]} : vector<4x128xf32> to vector<1x128xf32>
    %53 = vector.extract_strided_slice %49 {offsets = [3, 0], sizes = [1, 128], strides = [1, 1]} : vector<4x128xf32> to vector<1x128xf32>
    %54 = vector.broadcast %50 : vector<1x128xf32> to vector<8x128xf32>
    %55 = vector.broadcast %2 : vector<8x1xf32> to vector<8x128xf32>
    %56 = arith.maximumf %54, %55 : vector<8x128xf32>
    %57 = vector.broadcast %51 : vector<1x128xf32> to vector<8x128xf32>
    %58 = vector.broadcast %3 : vector<8x1xf32> to vector<8x128xf32>
    %59 = arith.maximumf %57, %58 : vector<8x128xf32>
    %60 = vector.broadcast %52 : vector<1x128xf32> to vector<8x128xf32>
    %61 = vector.broadcast %4 : vector<8x1xf32> to vector<8x128xf32>
    %62 = arith.minimumf %60, %61 : vector<8x128xf32>
    %63 = vector.broadcast %53 : vector<1x128xf32> to vector<8x128xf32>
    %64 = vector.broadcast %5 : vector<8x1xf32> to vector<8x128xf32>
    %65 = arith.minimumf %63, %64 : vector<8x128xf32>
    %66 = arith.subf %62, %56 : vector<8x128xf32>
    %67 = arith.subf %65, %59 : vector<8x128xf32>
    %68 = arith.mulf %66, %67 : vector<8x128xf32>
    %69 = arith.cmpf olt, %56, %62 : vector<8x128xf32>
    %70 = arith.cmpf olt, %59, %65 : vector<8x128xf32>
    %71 = arith.andi %69, %70 : vector<8x128xi1>
    %72 = arith.extui %71 : vector<8x128xi1> to vector<8x128xi32>
    %73 = arith.sitofp %72 : vector<8x128xi32> to vector<8x128xf32>
    %74 = arith.mulf %68, %73 : vector<8x128xf32>
    %75 = arith.subf %52, %50 : vector<1x128xf32>
    %76 = arith.subf %53, %51 : vector<1x128xf32>
    %77 = arith.mulf %75, %76 : vector<1x128xf32>
    %78 = vector.broadcast %77 : vector<1x128xf32> to vector<8x128xf32>
    %79 = vector.broadcast %8 : vector<8x1xf32> to vector<8x128xf32>
    %80 = arith.addf %78, %79 : vector<8x128xf32>
    %81 = arith.subf %80, %74 : vector<8x128xf32>
    %cst_10 = arith.constant 9.99999971E-10 : f32
    %82 = vector.broadcast %cst_10 : f32 to vector<8x128xf32>
    %83 = arith.maximumf %81, %82 : vector<8x128xf32>
    %84 = arith.divf %74, %83 : vector<8x128xf32>
    %c0_11 = arith.constant 0 : index
    %c0_12 = arith.constant 0 : index
    %c0_13 = arith.constant 0 : index
    %85 = vector.load %arg5[%c0_11, %c0_12, %c0_13] : memref<1x8x128xf32, #tpu.memory_space<vmem>>, vector<1x8x128xf32>
    %86 = vector.shape_cast %85 : vector<1x8x128xf32> to vector<8x128xf32>
    %87 = vector.shape_cast %84 : vector<8x128xf32> to vector<1x8x128xf32>
    tpu.vector_store %arg5[%c0_11, %c0_12, %c0_13], %87 {strides = array<i32>} : memref<1x8x128xf32, #tpu.memory_space<vmem>>, vector<1x8x128xf32>,
    return
  }
  func.func @transform_0(%arg0: i32) -> (i32, i32) {
    %c0_i32 = arith.constant 0 : i32
    %c0_i32_0 = arith.constant 0 : i32
    %c0_i32_1 = arith.constant 0 : i32
    return %c0_i32, %c0_i32_0 : i32, i32
  }
  func.func @transform_1(%arg0: i32) -> (i32, i32, i32) {
    %c0_i32 = arith.constant 0 : i32
    %c0_i32_0 = arith.constant 0 : i32
    %c0_i32_1 = arith.constant 0 : i32
    return %arg0, %c0_i32, %c0_i32_0 : i32, i32, i32
  }
  func.func @transform_2(%arg0: i32) -> (i32, i32, i32) {
    %c0_i32 = arith.constant 0 : i32
    %c0_i32_0 = arith.constant 0 : i32
    %c0_i32_1 = arith.constant 0 : i32
    return %arg0, %c0_i32, %c0_i32_0 : i32, i32, i32
  }
  func.func @transform_3(%arg0: i32) -> (i32, i32, i32) {
    %c0_i32 = arith.constant 0 : i32
    %c0_i32_0 = arith.constant 0 : i32
    %c0_i32_1 = arith.constant 0 : i32
    return %arg0, %c0_i32, %c0_i32_0 : i32, i32, i32
  }
  func.func @transform_4(%arg0: i32) -> (i32, i32, i32) {
    %c0_i32 = arith.constant 0 : i32
    %c0_i32_0 = arith.constant 0 : i32
    %c0_i32_1 = arith.constant 0 : i32
    return %arg0, %c0_i32, %c0_i32_0 : i32, i32, i32
  }
}

</mosaic_0001>

<llo_original>
// kernel: _stage1_impl.2
$region0: #{_stage1_impl.2}
  #allocation0 [shape = 'u32[]', space=smem, size = 0x4, offset = 0x4, fixed_abs, tag = 'smem constant byte address 0x4 - core index']
  #allocation1 [shape = 'u32[72,128]{1,0:T(1,128)}', space=vmem, size = 0x9000, scoped, tag = 'internal scratch']
  %s0 = inlined_call_operand.vmem [shape: f32[32,4], index: 0, kind: input, shape index: {}]
  %s1 = inlined_call_operand.vmem [shape: f32[4,128], index: 1, kind: input, shape index: {}]
  %s2 = inlined_call_operand.vmem [shape: f32[1,128], index: 2, kind: input, shape index: {}, may-alias: {2,4,6}]
  %s3 = inlined_call_operand.vmem [shape: bf16[128,128], index: 3, kind: input, shape index: {}]
  %s4 = inlined_call_operand.vmem [shape: f32[1,128], index: 4, kind: input, shape index: {}, may-alias: {2,4,6}]
  %s5 = inlined_call_operand.vmem [shape: bf16[128,128], index: 5, kind: input, shape index: {}]
  %s6 = inlined_call_operand.vmem [shape: f32[1,128], index: 6, kind: input, shape index: {}, may-alias: {2,4,6}]
  %s7 = inlined_call_operand.vmem [shape: bf16[32,128], index: 7, kind: output, shape index: {0}]
  %s8 = inlined_call_operand.vmem [shape: f32[32,128], index: 8, kind: output, shape index: {1}]
  %9 = xla_tuple %s7, %s8
  %s10 = sld [smem:[#allocation0]]
  $region69: #{_stage1_impl.2} parent=0
    _
  %s12 = ssub.s32 1, %s10
  %s13 = scalar_select 0, %s12, %s10
  loop: start=0, step=1, limit=4
  $region2: #{_stage1_impl.2} parent=0 // loop_pre_header
    _
  $region3: #{_stage1_impl.2} parent=0 // loop_header
    %s15 = sphi 0, %s19
    %p16 = scmp.ge.s32.totalorder %s15, 4
    %s25 = sphi 0, %s27
    %s28 = sphi 0, %s25
    %s29 = sphi 0, %s28
    %s45 = sphi 0, %s29
    %s49 = sphi 0, %s49
    %s51 = sphi 0, %s49
    %s52 = sphi 0, %s51
    %s66 = sphi 0, %s52
    %s70 = sphi 0, %s70
    %s72 = sphi 0, %s70
    %s73 = sphi 0, %s72
    %s87 = sphi 0, %s73
    %s91 = sphi 0, %s91
    %s93 = sphi 0, %s91
    %s94 = sphi 0, %s93
    %s108 = sphi 0, %s94
    %s112 = sphi 0, %s112
    %s114 = sphi 0, %s112
    %s115 = sphi 0, %s114
    %s129 = sphi 0, %s115
    %s133 = sphi 0, %s133
    %s135 = sphi 0, %s133
    %s136 = sphi 0, %s135
    %s150 = sphi 0, %s136
    %s154 = sphi 0, %s154
    %s156 = sphi 0, %s154
    %s157 = sphi 0, %s156
    %s171 = sphi 0, %s157
    %s177 = sphi 0, %s179
    %s180 = sphi 0, %s177
    %s181 = sphi 0, %s180
    %s197 = sphi 0, %s181
    %s203 = sphi 0, %s205
    %s206 = sphi 0, %s203
    %s207 = sphi 0, %s206
    %s223 = sphi 0, %s207
  $region4: #{_stage1_impl.2} parent=0 // loop_header_branch
    %18 = sbr.rel (%p16) target = $region8
  $region5: #{_stage1_impl.2} parent=0 // loop_body
    %s20 = ssub.s32 %s15, 1
    %s21 = ssub.s32 %s15, 2
    %s22 = sadd.s32 %s15, 1
    %s23 = ssub.s32 %s15, %s22
    %p24 = scmp.eq.s32.totalorder %s23, 0
    %s26 = sadd.s32 %s25, 1
    %s27 = scalar_select %p24, %s25, %s26
    %p30 = pneg %p24
    %p31 = scmp.eq.s32.totalorder %s15, 1
    %p32 = por %p30, %p31
    %p33 = scmp.ne.s32.totalorder %s25, %s28
    %p34 = scmp.eq.s32.totalorder %s15, 0
    %p35 = por %p33, %p34
    %p36 = scmp.ne.s32.totalorder %s25, %s28
    %p37 = scmp.eq.s32.totalorder %s20, 1
    %p38 = por %p36, %p37
    %p39 = scmp.ne.s32.totalorder %s28, %s29
    %p40 = scmp.eq.s32.totalorder %s20, 0
    %p41 = por %p39, %p40
    %p42 = scmp.ne.s32.totalorder %s28, %s29
    %p43 = scmp.eq.s32.totalorder %s21, 1
    %p44 = por %p42, %p43
    %p46 = scmp.ne.s32.totalorder %s29, %s45
    %p47 = scmp.eq.s32.totalorder %s21, 0
    %p48 = por %p46, %p47
    %s50 = sadd.s32 %s49, 1
    %p53 = scmp.eq.s32.totalorder %s15, 1
    %p54 = scmp.ne.s32.totalorder %s49, %s51
    %p55 = scmp.eq.s32.totalorder %s15, 0
    %p56 = por %p54, %p55
    %p57 = scmp.ne.s32.totalorder %s49, %s51
    %p58 = scmp.eq.s32.totalorder %s20, 1
    %p59 = por %p57, %p58
    %p60 = scmp.ne.s32.totalorder %s51, %s52
    %p61 = scmp.eq.s32.totalorder %s20, 0
    %p62 = por %p60, %p61
    %p63 = scmp.ne.s32.totalorder %s51, %s52
    %p64 = scmp.eq.s32.totalorder %s21, 1
    %p65 = por %p63, %p64
    %p67 = scmp.ne.s32.totalorder %s52, %s66
    %p68 = scmp.eq.s32.totalorder %s21, 0
    %p69 = por %p67, %p68
    %s71 = sadd.s32 %s70, 1
    %p74 = scmp.eq.s32.totalorder %s15, 1
    %p75 = scmp.ne.s32.totalorder %s70, %s72
    %p76 = scmp.eq.s32.totalorder %s15, 0
    %p77 = por %p75, %p76
    %p78 = scmp.ne.s32.totalorder %s70, %s72
    %p79 = scmp.eq.s32.totalorder %s20, 1
    %p80 = por %p78, %p79
    %p81 = scmp.ne.s32.totalorder %s72, %s73
    %p82 = scmp.eq.s32.totalorder %s20, 0
    %p83 = por %p81, %p82
    %p84 = scmp.ne.s32.totalorder %s72, %s73
    %p85 = scmp.eq.s32.totalorder %s21, 1
    %p86 = por %p84, %p85
    %p88 = scmp.ne.s32.totalorder %s73, %s87
    %p89 = scmp.eq.s32.totalorder %s21, 0
    %p90 = por %p88, %p89
    %s92 = sadd.s32 %s91, 1
    %p95 = scmp.eq.s32.totalorder %s15, 1
    %p96 = scmp.ne.s32.totalorder %s91, %s93
    %p97 = scmp.eq.s32.totalorder %s15, 0
    %p98 = por %p96, %p97
    %p99 = scmp.ne.s32.totalorder %s91, %s93
    %p100 = scmp.eq.s32.totalorder %s20, 1
    %p101 = por %p99, %p100
    %p102 = scmp.ne.s32.totalorder %s93, %s94
    %p103 = scmp.eq.s32.totalorder %s20, 0
    %p104 = por %p102, %p103
    %p105 = scmp.ne.s32.totalorder %s93, %s94
    %p106 = scmp.eq.s32.totalorder %s21, 1
    %p107 = por %p105, %p106
    %p109 = scmp.ne.s32.totalorder %s94, %s108
    %p110 = scmp.eq.s32.totalorder %s21, 0
    %p111 = por %p109, %p110
    %s113 = sadd.s32 %s112, 1
    %p116 = scmp.eq.s32.totalorder %s15, 1
    %p117 = scmp.ne.s32.totalorder %s112, %s114
    %p118 = scmp.eq.s32.totalorder %s15, 0
    %p119 = por %p117, %p118
    %p120 = scmp.ne.s32.totalorder %s112, %s114
    %p121 = scmp.eq.s32.totalorder %s20, 1
    %p122 = por %p120, %p121
    %p123 = scmp.ne.s32.totalorder %s114, %s115
    %p124 = scmp.eq.s32.totalorder %s20, 0
    %p125 = por %p123, %p124
    %p126 = scmp.ne.s32.totalorder %s114, %s115
    %p127 = scmp.eq.s32.totalorder %s21, 1
    %p128 = por %p126, %p127
    %p130 = scmp.ne.s32.totalorder %s115, %s129
    %p131 = scmp.eq.s32.totalorder %s21, 0
    %p132 = por %p130, %p131
    %s134 = sadd.s32 %s133, 1
    %p137 = scmp.eq.s32.totalorder %s15, 1
    %p138 = scmp.ne.s32.totalorder %s133, %s135
    %p139 = scmp.eq.s32.totalorder %s15, 0
    %p140 = por %p138, %p139
    %p141 = scmp.ne.s32.totalorder %s133, %s135
    %p142 = scmp.eq.s32.totalorder %s20, 1
    %p143 = por %p141, %p142
    %p144 = scmp.ne.s32.totalorder %s135, %s136
    %p145 = scmp.eq.s32.totalorder %s20, 0
    %p146 = por %p144, %p145
    %p147 = scmp.ne.s32.totalorder %s135, %s136
    %p148 = scmp.eq.s32.totalorder %s21, 1
    %p149 = por %p147, %p148
    %p151 = scmp.ne.s32.totalorder %s136, %s150
    %p152 = scmp.eq.s32.totalorder %s21, 0
    %p153 = por %p151, %p152
    %s155 = sadd.s32 %s154, 1
    %p158 = scmp.eq.s32.totalorder %s15, 1
    %p159 = scmp.ne.s32.totalorder %s154, %s156
    %p160 = scmp.eq.s32.totalorder %s15, 0
    %p161 = por %p159, %p160
    %p162 = scmp.ne.s32.totalorder %s154, %s156
    %p163 = scmp.eq.s32.totalorder %s20, 1
    %p164 = por %p162, %p163
    %p165 = scmp.ne.s32.totalorder %s156, %s157
    %p166 = scmp.eq.s32.totalorder %s20, 0
    %p167 = por %p165, %p166
    %p168 = scmp.ne.s32.totalorder %s156, %s157
    %p169 = scmp.eq.s32.totalorder %s21, 1
    %p170 = por %p168, %p169
    %p172 = scmp.ne.s32.totalorder %s157, %s171
    %p173 = scmp.eq.s32.totalorder %s21, 0
    %p174 = por %p172, %p173
    %s175 = ssub.s32 %s15, %s22
    %p176 = scmp.eq.s32.totalorder %s175, 0
    %s178 = sadd.s32 %s177, 1
    %s179 = scalar_select %p176, %s177, %s178
    %p182 = pneg %p176
    %p183 = scmp.eq.s32.totalorder %s15, 1
    %p184 = por %p182, %p183
    %p185 = scmp.ne.s32.totalorder %s177, %s180
    %p186 = scmp.eq.s32.totalorder %s15, 0
    %p187 = por %p185, %p186
    %p188 = scmp.ne.s32.totalorder %s177, %s180
    %p189 = scmp.eq.s32.totalorder %s20, 1
    %p190 = por %p188, %p189
    %p191 = scmp.ne.s32.totalorder %s180, %s181
    %p192 = scmp.eq.s32.totalorder %s20, 0
    %p193 = por %p191, %p192
    %p194 = scmp.ne.s32.totalorder %s180, %s181
    %p195 = scmp.eq.s32.totalorder %s21, 1
    %p196 = por %p194, %p195
    %p198 = scmp.ne.s32.totalorder %s181, %s197
    %p199 = scmp.eq.s32.totalorder %s21, 0
    %p200 = por %p198, %p199
    %s201 = ssub.s32 %s15, %s22
    %p202 = scmp.eq.s32.totalorder %s201, 0
    %s204 = sadd.s32 %s203, 1
    %s205 = scalar_select %p202, %s203, %s204
    %p208 = pneg %p202
    %p209 = scmp.eq.s32.totalorder %s15, 1
    %p210 = por %p208, %p209
    %p211 = scmp.ne.s32.totalorder %s203, %s206
    %p212 = scmp.eq.s32.totalorder %s15, 0
    %p213 = por %p211, %p212
    %p214 = scmp.ne.s32.totalorder %s203, %s206
    %p215 = scmp.eq.s32.totalorder %s20, 1
    %p216 = por %p214, %p215
    %p217 = scmp.ne.s32.totalorder %s206, %s207
    %p218 = scmp.eq.s32.totalorder %s20, 0
    %p219 = por %p217, %p218
    %p220 = scmp.ne.s32.totalorder %s206, %s207
    %p221 = scmp.eq.s32.totalorder %s21, 1
    %p222 = por %p220, %p221
    %p224 = scmp.ne.s32.totalorder %s207, %s223
    %p225 = scmp.eq.s32.totalorder %s21, 0
    %p226 = por %p224, %p225
    %p227 = scmp.le.s32.totalorder 1, %s15
    %p228 = scmp.lt.s32.totalorder %s15, 3
    %p229 = pnand %p227, %p228
    %p230 = pneg %p229
    // Predicated region
    $region9: #{_stage1_impl.2} parent=5 // pred_check
      _
    $region10: #{_stage1_impl.2} parent=5 // pred_check_branch
      %232 = sbr.rel (%p229) target = $region12
    $region11: #{_stage1_impl.2} parent=5 // pred_region
      %s233 = ssub.s32 %s15, 1
      // Predicated region
      $region13: #{_stage1_impl.2} parent=11 // pred_check
        %p234 = pneg %p62
      $region14: #{_stage1_impl.2} parent=11 // pred_check_branch
        %236 = sbr.rel (%p234) target = $region16
      $region15: #{_stage1_impl.2} parent=11 // pred_region
        _
      $region16: #{_stage1_impl.2} parent=11 // pred_fallthru
        _
      // Predicated region
      $region17: #{_stage1_impl.2} parent=11 // pred_check
        %p237 = pneg %p83
      $region18: #{_stage1_impl.2} parent=11 // pred_check_branch
        %239 = sbr.rel (%p237) target = $region20
      $region19: #{_stage1_impl.2} parent=11 // pred_region
        _
      $region20: #{_stage1_impl.2} parent=11 // pred_fallthru
        _
      // Predicated region
      $region21: #{_stage1_impl.2} parent=11 // pred_check
        %p240 = pneg %p104
      $region22: #{_stage1_impl.2} parent=11 // pred_check_branch
        %242 = sbr.rel (%p240) target = $region24
      $region23: #{_stage1_impl.2} parent=11 // pred_region
        _
      $region24: #{_stage1_impl.2} parent=11 // pred_fallthru
        _
      // Predicated region
      $region25: #{_stage1_impl.2} parent=11 // pred_check
        %p243 = pneg %p125
      $region26: #{_stage1_impl.2} parent=11 // pred_check_branch
        %245 = sbr.rel (%p243) target = $region28
      $region27: #{_stage1_impl.2} parent=11 // pred_region
        _
      $region28: #{_stage1_impl.2} parent=11 // pred_fallthru
        _
      // Predicated region
      $region29: #{_stage1_impl.2} parent=11 // pred_check
        %p246 = pneg %p146
      $region30: #{_stage1_impl.2} parent=11 // pred_check_branch
        %248 = sbr.rel (%p246) target = $region32
      $region31: #{_stage1_impl.2} parent=11 // pred_region
        _
      $region32: #{_stage1_impl.2} parent=11 // pred_fallthru
        _
      // Predicated region
      $region33: #{_stage1_impl.2} parent=11 // pred_check
        %p249 = pneg %p167
      $region34: #{_stage1_impl.2} parent=11 // pred_check_branch
        %251 = sbr.rel (%p249) target = $region36
      $region35: #{_stage1_impl.2} parent=11 // pred_region
        _
      $region36: #{_stage1_impl.2} parent=11 // pred_fallthru
        _
    $region12: #{_stage1_impl.2} parent=5 // pred_fallthru
      _
    %p252 = scmp.lt.s32.totalorder %s15, 2
    // Predicated region
    $region37: #{_stage1_impl.2} parent=5 // pred_check
      %p253 = pneg %p252
    $region38: #{_stage1_impl.2} parent=5 // pred_check_branch
      %255 = sbr.rel (%p253) target = $region40
    $region39: #{_stage1_impl.2} parent=5 // pred_region
      // Predicated region
      $region41: #{_stage1_impl.2} parent=39 // pred_check
        %p256 = pneg %p35
      $region42: #{_stage1_impl.2} parent=39 // pred_check_branch
        %258 = sbr.rel (%p256) target = $region44
      $region43: #{_stage1_impl.2} parent=39 // pred_region
        %s259 = smul.u32 2, %s15
        %p260 = scmp.lt.s32.totalorder %s259, 3
        %s261 = scalar_select %p260, %s259, 3
        %s262 = smul.addr %s261, 8
        %s263 = scalar_lea.vmem %s0, %s262
        %s264 = smul.u32 2, %s15
      $region44: #{_stage1_impl.2} parent=39 // pred_fallthru
        _
    $region40: #{_stage1_impl.2} parent=5 // pred_fallthru
      _
    %p265 = scmp.le.s32.totalorder 1, %s15
    %p266 = scmp.lt.s32.totalorder %s15, 3
    %p267 = pnand %p265, %p266
    %p268 = pneg %p267
    // Predicated region
    $region45: #{_stage1_impl.2} parent=5 // pred_check
      _
    $region46: #{_stage1_impl.2} parent=5 // pred_check_branch
      %270 = sbr.rel (%p267) target = $region48
    $region47: #{_stage1_impl.2} parent=5 // pred_region
      %s271 = ssub.s32 %s15, 1
      %s272 = smul.u32 2, %s20
      %p273 = scmp.lt.s32.totalorder %s272, 3
      %s274 = scalar_select %p273, %s272, 3
      %s275 = smul.addr %s274, 8
      %s276 = scalar_lea.vmem %s0, %s275
      %p277 = pneg %p41
      %p278 = pneg %p38
      %p279 = pneg %p62
      %p280 = pneg %p59
      %p281 = pneg %p83
      %p282 = pneg %p80
      %p283 = pneg %p104
      %p284 = pneg %p101
      %p285 = pneg %p125
      %p286 = pneg %p122
      %p287 = pneg %p146
      %p288 = pneg %p143
      %p289 = pneg %p167
      %p290 = pneg %p164
      %p291 = pneg %p193
      %p292 = pneg %p190
      %s293 = smul.u32 2, %s20
      %p294 = scmp.lt.s32.totalorder %s293, 3
      %s295 = scalar_select %p294, %s293, 3
      %s296 = smul.addr %s295, 4
      %s297 = scalar_lea.vmem %s7, %s296
      %p298 = pneg %p219
      %p299 = pneg %p216
      %s300 = smul.u32 2, %s20
      %p301 = scmp.lt.s32.totalorder %s300, 3
      %s302 = scalar_select %p301, %s300, 3
      %s303 = smul.addr %s302, 8
      %s304 = scalar_lea.vmem %s8, %s303
      %s305 = smul.u32 2, %s20
      %p306 = scmp.lt.s32.totalorder %s305, 3
      %s307 = scalar_select %p306, %s305, 3
      %s308 = smul.addr %s307, 8
      %s309 = scalar_lea.vmem %s0, %s308
      %s310 = smul.u32 2, %s20
      %s311 = smul.u32 2, %s20
      %p312 = scmp.lt.s32.totalorder %s311, 3
      %s313 = scalar_select %p312, %s311, 3
      %s314 = smul.addr %s313, 4
      %s315 = scalar_lea.vmem %s7, %s314
      %s316 = smul.u32 2, %s20
      %s317 = smul.u32 2, %s20
      %p318 = scmp.lt.s32.totalorder %s317, 3
      %s319 = scalar_select %p318, %s317, 3
      %s320 = smul.addr %s319, 8
      %s321 = scalar_lea.vmem %s8, %s320
      %s322 = smul.u32 2, %s20
      %v323 = vld [vmem:[%s309] sm:$0xff]
      %v324 = vld [vmem:[%s309 + $0x8] sm:$0xff]
      %v325 = vld [vmem:[%s1] sm:$0xf]
      %327 = vset.pattern.permute.xlu0 0
      %328 = vperm.xlu0 %327, %v323
      %v329 = vpop.permute.xlu0 %328
      %332 = vset.pattern.permute.xlu0 0
      %333 = vperm.xlu0 %332, %v324
      %v334 = vpop.permute.xlu0 %333
      %v336 = vperm.slane %v325, 0
      %v337 = vmul.f32 %v329, %v336
      %v338 = vmul.f32 %v334, %v336
      %339 = vset.pattern.permute.xlu0 1
      %340 = vperm.xlu0 %339, %v323
      %v341 = vpop.permute.xlu0 %340
      %343 = vset.pattern.permute.xlu0 1
      %344 = vperm.xlu0 %343, %v324
      %v345 = vpop.permute.xlu0 %344
      %v347 = vperm.slane %v325, 1
      %v348 = vmul.f32 %v341, %v347
      %v349 = vmul.f32 %v345, %v347
      %v350 = vadd.f32 %v337, %v348
      %v351 = vadd.f32 %v338, %v349
      %352 = vset.pattern.permute.xlu0 2
      %353 = vperm.xlu0 %352, %v323
      %v354 = vpop.permute.xlu0 %353
      %356 = vset.pattern.permute.xlu0 2
      %357 = vperm.xlu0 %356, %v324
      %v358 = vpop.permute.xlu0 %357
      %v360 = vperm.slane %v325, 2
      %v361 = vmul.f32 %v354, %v360
      %v362 = vmul.f32 %v358, %v360
      %v363 = vadd.f32 %v350, %v361
      %v364 = vadd.f32 %v351, %v362
      %365 = vset.pattern.permute.xlu0 3
      %366 = vperm.xlu0 %365, %v323
      %v367 = vpop.permute.xlu0 %366
      %369 = vset.pattern.permute.xlu0 3
      %370 = vperm.xlu0 %369, %v324
      %v371 = vpop.permute.xlu0 %370
      %v373 = vperm.slane %v325, 3
      %v374 = vmul.f32 %v367, %v373
      %v375 = vmul.f32 %v371, %v373
      %v376 = vadd.f32 %v363, %v374
      %v377 = vadd.f32 %v364, %v375
      %v378 = vld [vmem:[%s2] sm:$0x1]
      %v380 = vperm.slane %v378, 0
      %v382 = vadd.f32 %v376, %v380
      %v383 = vadd.f32 %v377, %v380
      %v384 = vmax.f32 %v382, 0.0
      %v385 = vmax.f32 %v383, 0.0
      %v386 = vpack.c.bf16 %v384, %v384
      %v387 = vpack.c.bf16 %v385, %v385
      %388 = vst [vmem:[%s315] sm:$0xf] %v386
      %389 = vst [vmem:[%s315 + $0x4] sm:$0xf] %v387
      %v390 = vld [vmem:[%s3] sm:$0xf]
      %v391 = vld [vmem:[%s3 + $0x4] sm:$0xf]
      %v392 = vld [vmem:[%s3 + $0x8] sm:$0xf]
      %v393 = vld [vmem:[%s3 + $0xc] sm:$0xf]
      %v394 = vld [vmem:[%s3 + $0x10] sm:$0xf]
      %v395 = vld [vmem:[%s3 + $0x14] sm:$0xf]
      %v396 = vld [vmem:[%s3 + $0x18] sm:$0xf]
      %v397 = vld [vmem:[%s3 + $0x1c] sm:$0xf]
      %v398 = vld [vmem:[%s3 + $0x20] sm:$0xf]
      %v399 = vld [vmem:[%s3 + $0x24] sm:$0xf]
      %v400 = vld [vmem:[%s3 + $0x28] sm:$0xf]
      %v401 = vld [vmem:[%s3 + $0x2c] sm:$0xf]
      %v402 = vld [vmem:[%s3 + $0x30] sm:$0xf]
      %v403 = vld [vmem:[%s3 + $0x34] sm:$0xf]
      %v404 = vld [vmem:[%s3 + $0x38] sm:$0xf]
      %v405 = vld [vmem:[%s3 + $0x3c] sm:$0xf]
      %v406 = vld [vmem:[%s4] sm:$0x1]
      %v408 = vperm.slane %v406, 0
      %v412 = vunpack.c.l.b16 %v386
      %v413 = vunpack.c.l.b16 %v387
      %v414 = vpack.c.b16 %v413, %v412
      %v432 = vunpack.c.l.b16 %v390
      %v433 = vunpack.c.l.b16 %v391
      %v434 = vunpack.c.l.b16 %v392
      %v435 = vunpack.c.l.b16 %v393
      %v436 = vunpack.c.l.b16 %v394
      %v437 = vunpack.c.l.b16 %v395
      %v438 = vunpack.c.l.b16 %v396
      %v439 = vunpack.c.l.b16 %v397
      %v440 = vunpack.c.l.b16 %v398
      %v441 = vunpack.c.l.b16 %v399
      %v442 = vunpack.c.l.b16 %v400
      %v443 = vunpack.c.l.b16 %v401
      %v444 = vunpack.c.l.b16 %v402
      %v445 = vunpack.c.l.b16 %v403
      %v446 = vunpack.c.l.b16 %v404
      %v447 = vunpack.c.l.b16 %v405
      %v448 = vpack.c.b16 %v433, %v432
      %v449 = vpack.c.b16 %v435, %v434
      %v450 = vpack.c.b16 %v437, %v436
      %v451 = vpack.c.b16 %v439, %v438
      %v452 = vpack.c.b16 %v441, %v440
      %v453 = vpack.c.b16 %v443, %v442
      %v454 = vpack.c.b16 %v445, %v444
      %v455 = vpack.c.b16 %v447, %v446
      %464 = vmatpush.bf16.msra.mxu0 %v455
      %465 = vmatpush.bf16.msra.mxu0 %v454
      %466 = vmatpush.bf16.msra.mxu0 %v453
      %467 = vmatpush.bf16.msra.mxu0 %v452
      %468 = vmatpush.bf16.msra.mxu0 %v451
      %469 = vmatpush.bf16.msra.mxu0 %v450
      %470 = vmatpush.bf16.msra.mxu0 %v449
      %471 = vmatpush.bf16.msra.mxu0 %v448
      %472 = vmatmul.bf16.gmra.mxu0 %v414
      %v473 = vpop.f32.mrf.mxu0
      %v474 = vadd.f32 %v408, %v473
      %v475 = vpop.f32.mrf.mxu0
      %v476 = vadd.f32 %v408, %v475
      %477 = vdwg.mxu0
      %v478 = vmax.f32 %v474, 0.0
      %v479 = vmax.f32 %v476, 0.0
      %v480 = vpack.c.bf16 %v479, %v478
      %v481 = vld [vmem:[%s5] sm:$0xf]
      %v482 = vld [vmem:[%s5 + $0x4] sm:$0xf]
      %v483 = vld [vmem:[%s5 + $0x8] sm:$0xf]
      %v484 = vld [vmem:[%s5 + $0xc] sm:$0xf]
      %v485 = vld [vmem:[%s5 + $0x10] sm:$0xf]
      %v486 = vld [vmem:[%s5 + $0x14] sm:$0xf]
      %v487 = vld [vmem:[%s5 + $0x18] sm:$0xf]
      %v488 = vld [vmem:[%s5 + $0x1c] sm:$0xf]
      %v489 = vld [vmem:[%s5 + $0x20] sm:$0xf]
      %v490 = vld [vmem:[%s5 + $0x24] sm:$0xf]
      %v491 = vld [vmem:[%s5 + $0x28] sm:$0xf]
      %v492 = vld [vmem:[%s5 + $0x2c] sm:$0xf]
      %v493 = vld [vmem:[%s5 + $0x30] sm:$0xf]
      %v494 = vld [vmem:[%s5 + $0x34] sm:$0xf]
      %v495 = vld [vmem:[%s5 + $0x38] sm:$0xf]
      %v496 = vld [vmem:[%s5 + $0x3c] sm:$0xf]
      %v497 = vld [vmem:[%s6] sm:$0x1]
      %v499 = vperm.slane %v497, 0
      %v517 = vunpack.c.l.b16 %v481
      %v518 = vunpack.c.l.b16 %v482
      %v519 = vunpack.c.l.b16 %v483
      %v520 = vunpack.c.l.b16 %v484
      %v521 = vunpack.c.l.b16 %v485
      %v522 = vunpack.c.l.b16 %v486
      %v523 = vunpack.c.l.b16 %v487
      %v524 = vunpack.c.l.b16 %v488
      %v525 = vunpack.c.l.b16 %v489
      %v526 = vunpack.c.l.b16 %v490
      %v527 = vunpack.c.l.b16 %v491
      %v528 = vunpack.c.l.b16 %v492
      %v529 = vunpack.c.l.b16 %v493
      %v530 = vunpack.c.l.b16 %v494
      %v531 = vunpack.c.l.b16 %v495
      %v532 = vunpack.c.l.b16 %v496
      %v533 = vpack.c.b16 %v518, %v517
      %v534 = vpack.c.b16 %v520, %v519
      %v535 = vpack.c.b16 %v522, %v521
      %v536 = vpack.c.b16 %v524, %v523
      %v537 = vpack.c.b16 %v526, %v525
      %v538 = vpack.c.b16 %v528, %v527
      %v539 = vpack.c.b16 %v530, %v529
      %v540 = vpack.c.b16 %v532, %v531
      %549 = vmatpush.bf16.msra.mxu0 %v540
      %550 = vmatpush.bf16.msra.mxu0 %v539
      %551 = vmatpush.bf16.msra.mxu0 %v538
      %552 = vmatpush.bf16.msra.mxu0 %v537
      %553 = vmatpush.bf16.msra.mxu0 %v536
      %554 = vmatpush.bf16.msra.mxu0 %v535
      %555 = vmatpush.bf16.msra.mxu0 %v534
      %556 = vmatpush.bf16.msra.mxu0 %v533
      %557 = vmatmul.bf16.gmra.mxu0 %v480
      %v558 = vpop.f32.mrf.mxu0
      %v559 = vadd.f32 %v499, %v558
      %v560 = vpop.f32.mrf.mxu0
      %v561 = vadd.f32 %v499, %v560
      %562 = vdwg.mxu0
      %563 = vst [vmem:[%s321] sm:$0xff] %v559
      %564 = vst [vmem:[%s321 + $0x8] sm:$0xff] %v561
      %s565 = smul.u32 2, %s20
      %p566 = scmp.lt.s32.totalorder %s565, 3
      %s567 = scalar_select %p566, %s565, 3
      %s568 = smul.addr %s567, 4
      %s569 = scalar_lea.vmem %s7, %s568
      %s570 = smul.u32 2, %s20
      %p571 = scmp.lt.s32.totalorder %s570, 3
      %s572 = scalar_select %p571, %s570, 3
      %s573 = smul.addr %s572, 8
      %s574 = scalar_lea.vmem %s8, %s573
      // Predicated region
      $region49: #{_stage1_impl.2} parent=47 // pred_check
        %p575 = pneg %p190
      $region50: #{_stage1_impl.2} parent=47 // pred_check_branch
        %577 = sbr.rel (%p575) target = $region52
      $region51: #{_stage1_impl.2} parent=47 // pred_region
        %s578 = smul.u32 2, %s20
      $region52: #{_stage1_impl.2} parent=47 // pred_fallthru
        _
      // Predicated region
      $region53: #{_stage1_impl.2} parent=47 // pred_check
        %p579 = pneg %p216
      $region54: #{_stage1_impl.2} parent=47 // pred_check_branch
        %581 = sbr.rel (%p579) target = $region56
      $region55: #{_stage1_impl.2} parent=47 // pred_region
        %s582 = smul.u32 2, %s20
      $region56: #{_stage1_impl.2} parent=47 // pred_fallthru
        _
    $region48: #{_stage1_impl.2} parent=5 // pred_fallthru
      _
    %p583 = scmp.le.s32.totalorder 2, %s15
    // Predicated region
    $region57: #{_stage1_impl.2} parent=5 // pred_check
      %p584 = pneg %p583
    $region58: #{_stage1_impl.2} parent=5 // pred_check_branch
      %586 = sbr.rel (%p584) target = $region60
    $region59: #{_stage1_impl.2} parent=5 // pred_region
      %s587 = ssub.s32 %s15, 2
      // Predicated region
      $region61: #{_stage1_impl.2} parent=59 // pred_check
        %p588 = pneg %p196
      $region62: #{_stage1_impl.2} parent=59 // pred_check_branch
        %590 = sbr.rel (%p588) target = $region64
      $region63: #{_stage1_impl.2} parent=59 // pred_region
        %s591 = smul.u32 2, %s21
        %p592 = scmp.lt.s32.totalorder %s591, 3
        %s593 = scalar_select %p592, %s591, 3
        %s594 = smul.addr %s593, 4
        %s595 = scalar_lea.vmem %s7, %s594
      $region64: #{_stage1_impl.2} parent=59 // pred_fallthru
        _
      // Predicated region
      $region65: #{_stage1_impl.2} parent=59 // pred_check
        %p596 = pneg %p222
      $region66: #{_stage1_impl.2} parent=59 // pred_check_branch
        %598 = sbr.rel (%p596) target = $region68
      $region67: #{_stage1_impl.2} parent=59 // pred_region
        %s599 = smul.u32 2, %s21
        %p600 = scmp.lt.s32.totalorder %s599, 3
        %s601 = scalar_select %p600, %s599, 3
        %s602 = smul.addr %s601, 8
        %s603 = scalar_lea.vmem %s8, %s602
      $region68: #{_stage1_impl.2} parent=59 // pred_fallthru
        _
    $region60: #{_stage1_impl.2} parent=5 // pred_fallthru
      _
  $region6: #{_stage1_impl.2} parent=0 // loop_footer
    %s19 = sadd.s32 1, %s15
  $region7: #{_stage1_impl.2} parent=0 // loop_footer_branch
    %14 = sbr.rel target = $region3
  $region8: #{_stage1_impl.2} parent=0 // loop_exit
    _

// kernel: _stage1_impl.3
$region0: #{_stage1_impl.3}
  #allocation0 [shape = 'u32[]', space=smem, size = 0x4, offset = 0x4, fixed_abs, tag = 'smem constant byte address 0x4 - core index']
  #allocation1 [shape = 'u32[72,128]{1,0:T(1,128)}', space=vmem, size = 0x9000, scoped, tag = 'internal scratch']
  %s0 = inlined_call_operand.vmem [shape: f32[4,128], index: 0, kind: input, shape index: {}]
  %s1 = inlined_call_operand.vmem [shape: f32[2,4,128], index: 1, kind: input, shape index: {}]
  %s2 = inlined_call_operand.vmem [shape: f32[2,8,4], index: 2, kind: input, shape index: {}]
  %s3 = inlined_call_operand.hbm [shape: f32[2,8,128], index: 3, kind: output, shape index: {0}]
  %s4 = inlined_call_operand.hbm [shape: f32[2,8,128], index: 4, kind: output, shape index: {1}]
  %5 = xla_tuple %s3, %s4
  %s6 = sld [smem:[#allocation0]]
  $region53: #{_stage1_impl.3} parent=0
    _
  %s8 = ssub.s32 1, %s6
  %s9 = scalar_select 0, %s8, %s6
  $region1: #{_stage1_impl.3} parent=0
    #allocation2 [shape = 'u8[8192]{0}', space=vmem, size = 0x2000, scoped, tag = 'output window, operand 0']
    #allocation3 [shape = 's32[2]{0}', space=sflag, size = 0x8, scoped, tag = 'scoped memory for _stage1_impl.3']
    #allocation4 [shape = 'u8[8192]{0}', space=vmem, size = 0x2000, scoped, tag = 'output window, operand 1']
    #allocation5 [shape = 's32[2]{0}', space=sflag, size = 0x8, scoped, tag = 'scoped memory for _stage1_impl.3']
    %10 = vsyncpa [#allocation3], 0
    %s11 = scalar_lea.sflag [#allocation3], 1
    %12 = vsyncpa %s11, 0
    %13 = vsyncpa [#allocation5], 0
    %s14 = scalar_lea.sflag [#allocation5], 1
    %15 = vsyncpa %s14, 0
    loop: start=0, step=1, limit=4
    $region2: #{_stage1_impl.3} parent=1 // loop_pre_header
      _
    $region3: #{_stage1_impl.3} parent=1 // loop_header
      %s17 = sphi 0, %s21
      %p18 = scmp.ge.s32.totalorder %s17, 4
      %s25 = sphi 0, %s25
      %s27 = sphi 0, %s25
      %s28 = sphi 0, %s27
      %s42 = sphi 0, %s28
      %s48 = sphi 0, %s50
      %s51 = sphi 0, %s48
      %s52 = sphi 0, %s51
      %s68 = sphi 0, %s52
      %s74 = sphi 0, %s76
      %s77 = sphi 0, %s74
      %s78 = sphi 0, %s77
      %s94 = sphi 0, %s78
      %s100 = sphi 0, %s102
      %s103 = sphi 0, %s100
      %s104 = sphi 0, %s103
      %s120 = sphi 0, %s104
      %s126 = sphi 0, %s128
      %s129 = sphi 0, %s126
      %s130 = sphi 0, %s129
      %s146 = sphi 0, %s130
    $region4: #{_stage1_impl.3} parent=1 // loop_header_branch
      %20 = sbr.rel (%p18) target = $region8
    $region5: #{_stage1_impl.3} parent=1 // loop_body
      %s22 = ssub.s32 %s17, 1
      %s23 = ssub.s32 %s17, 2
      %s24 = sadd.s32 %s17, 1
      %s26 = sadd.s32 %s25, 1
      %p29 = scmp.eq.s32.totalorder %s17, 1
      %p30 = scmp.ne.s32.totalorder %s25, %s27
      %p31 = scmp.eq.s32.totalorder %s17, 0
      %p32 = por %p30, %p31
      %p33 = scmp.ne.s32.totalorder %s25, %s27
      %p34 = scmp.eq.s32.totalorder %s22, 1
      %p35 = por %p33, %p34
      %p36 = scmp.ne.s32.totalorder %s27, %s28
      %p37 = scmp.eq.s32.totalorder %s22, 0
      %p38 = por %p36, %p37
      %p39 = scmp.ne.s32.totalorder %s27, %s28
      %p40 = scmp.eq.s32.totalorder %s23, 1
      %p41 = por %p39, %p40
      %p43 = scmp.ne.s32.totalorder %s28, %s42
      %p44 = scmp.eq.s32.totalorder %s23, 0
      %p45 = por %p43, %p44
      %s46 = ssub.s32 %s17, %s24
      %p47 = scmp.eq.s32.totalorder %s46, 0
      %s49 = sadd.s32 %s48, 1
      %s50 = scalar_select %p47, %s48, %s49
      %p53 = pneg %p47
      %p54 = scmp.eq.s32.totalorder %s17, 1
      %p55 = por %p53, %p54
      %p56 = scmp.ne.s32.totalorder %s48, %s51
      %p57 = scmp.eq.s32.totalorder %s17, 0
      %p58 = por %p56, %p57
      %p59 = scmp.ne.s32.totalorder %s48, %s51
      %p60 = scmp.eq.s32.totalorder %s22, 1
      %p61 = por %p59, %p60
      %p62 = scmp.ne.s32.totalorder %s51, %s52
      %p63 = scmp.eq.s32.totalorder %s22, 0
      %p64 = por %p62, %p63
      %p65 = scmp.ne.s32.totalorder %s51, %s52
      %p66 = scmp.eq.s32.totalorder %s23, 1
      %p67 = por %p65, %p66
      %p69 = scmp.ne.s32.totalorder %s52, %s68
      %p70 = scmp.eq.s32.totalorder %s23, 0
      %p71 = por %p69, %p70
      %s72 = ssub.s32 %s17, %s24
      %p73 = scmp.eq.s32.totalorder %s72, 0
      %s75 = sadd.s32 %s74, 1
      %s76 = scalar_select %p73, %s74, %s75
      %p79 = pneg %p73
      %p80 = scmp.eq.s32.totalorder %s17, 1
      %p81 = por %p79, %p80
      %p82 = scmp.ne.s32.totalorder %s74, %s77
      %p83 = scmp.eq.s32.totalorder %s17, 0
      %p84 = por %p82, %p83
      %p85 = scmp.ne.s32.totalorder %s74, %s77
      %p86 = scmp.eq.s32.totalorder %s22, 1
      %p87 = por %p85, %p86
      %p88 = scmp.ne.s32.totalorder %s77, %s78
      %p89 = scmp.eq.s32.totalorder %s22, 0
      %p90 = por %p88, %p89
      %p91 = scmp.ne.s32.totalorder %s77, %s78
      %p92 = scmp.eq.s32.totalorder %s23, 1
      %p93 = por %p91, %p92
      %p95 = scmp.ne.s32.totalorder %s78, %s94
      %p96 = scmp.eq.s32.totalorder %s23, 0
      %p97 = por %p95, %p96
      %s98 = ssub.s32 %s17, %s24
      %p99 = scmp.eq.s32.totalorder %s98, 0
      %s101 = sadd.s32 %s100, 1
      %s102 = scalar_select %p99, %s100, %s101
      %p105 = pneg %p99
      %p106 = scmp.eq.s32.totalorder %s17, 1
      %p107 = por %p105, %p106
      %p108 = scmp.ne.s32.totalorder %s100, %s103
      %p109 = scmp.eq.s32.totalorder %s17, 0
      %p110 = por %p108, %p109
      %p111 = scmp.ne.s32.totalorder %s100, %s103
      %p112 = scmp.eq.s32.totalorder %s22, 1
      %p113 = por %p111, %p112
      %p114 = scmp.ne.s32.totalorder %s103, %s104
      %p115 = scmp.eq.s32.totalorder %s22, 0
      %p116 = por %p114, %p115
      %p117 = scmp.ne.s32.totalorder %s103, %s104
      %p118 = scmp.eq.s32.totalorder %s23, 1
      %p119 = por %p117, %p118
      %p121 = scmp.ne.s32.totalorder %s104, %s120
      %p122 = scmp.eq.s32.totalorder %s23, 0
      %p123 = por %p121, %p122
      %s124 = ssub.s32 %s17, %s24
      %p125 = scmp.eq.s32.totalorder %s124, 0
      %s127 = sadd.s32 %s126, 1
      %s128 = scalar_select %p125, %s126, %s127
      %p131 = pneg %p125
      %p132 = scmp.eq.s32.totalorder %s17, 1
      %p133 = por %p131, %p132
      %p134 = scmp.ne.s32.totalorder %s126, %s129
      %p135 = scmp.eq.s32.totalorder %s17, 0
      %p136 = por %p134, %p135
      %p137 = scmp.ne.s32.totalorder %s126, %s129
      %p138 = scmp.eq.s32.totalorder %s22, 1
      %p139 = por %p137, %p138
      %p140 = scmp.ne.s32.totalorder %s129, %s130
      %p141 = scmp.eq.s32.totalorder %s22, 0
      %p142 = por %p140, %p141
      %p143 = scmp.ne.s32.totalorder %s129, %s130
      %p144 = scmp.eq.s32.totalorder %s23, 1
      %p145 = por %p143, %p144
      %p147 = scmp.ne.s32.totalorder %s130, %s146
      %p148 = scmp.eq.s32.totalorder %s23, 0
      %p149 = por %p147, %p148
      %p150 = scmp.le.s32.totalorder 1, %s17
      %p151 = scmp.lt.s32.totalorder %s17, 3
      %p152 = pnand %p150, %p151
      %p153 = pneg %p152
      // Predicated region
      $region9: #{_stage1_impl.3} parent=5 // pred_check
        _
      $region10: #{_stage1_impl.3} parent=5 // pred_check_branch
        %155 = sbr.rel (%p152) target = $region12
      $region11: #{_stage1_impl.3} parent=5 // pred_region
        %s156 = ssub.s32 %s17, 1
        // Predicated region
        $region13: #{_stage1_impl.3} parent=11 // pred_check
          %p157 = pneg %p38
        $region14: #{_stage1_impl.3} parent=11 // pred_check_branch
          %159 = sbr.rel (%p157) target = $region16
        $region15: #{_stage1_impl.3} parent=11 // pred_region
          _
        $region16: #{_stage1_impl.3} parent=11 // pred_fallthru
          _
      $region12: #{_stage1_impl.3} parent=5 // pred_fallthru
        _
      %p160 = scmp.lt.s32.totalorder %s17, 2
      // Predicated region
      $region17: #{_stage1_impl.3} parent=5 // pred_check
        %p161 = pneg %p160
      $region18: #{_stage1_impl.3} parent=5 // pred_check_branch
        %163 = sbr.rel (%p161) target = $region20
      $region19: #{_stage1_impl.3} parent=5 // pred_region
        // Predicated region
        $region21: #{_stage1_impl.3} parent=19 // pred_check
          %p164 = pneg %p58
        $region22: #{_stage1_impl.3} parent=19 // pred_check_branch
          %166 = sbr.rel (%p164) target = $region24
        $region23: #{_stage1_impl.3} parent=19 // pred_region
          %p167 = scmp.lt.s32.totalorder %s17, 1
          %s168 = scalar_select %p167, %s17, 1
          %s169 = smul.addr %s168, 4
          %s170 = scalar_lea.vmem %s1, %s169
        $region24: #{_stage1_impl.3} parent=19 // pred_fallthru
          _
        // Predicated region
        $region25: #{_stage1_impl.3} parent=19 // pred_check
          %p171 = pneg %p84
        $region26: #{_stage1_impl.3} parent=19 // pred_check_branch
          %173 = sbr.rel (%p171) target = $region28
        $region27: #{_stage1_impl.3} parent=19 // pred_region
          %p174 = scmp.lt.s32.totalorder %s17, 1
          %s175 = scalar_select %p174, %s17, 1
          %s176 = smul.addr %s175, 8
          %s177 = scalar_lea.vmem %s2, %s176
        $region28: #{_stage1_impl.3} parent=19 // pred_fallthru
          _
      $region20: #{_stage1_impl.3} parent=5 // pred_fallthru
        _
      %p178 = scmp.le.s32.totalorder 1, %s17
      %p179 = scmp.lt.s32.totalorder %s17, 3
      %p180 = pnand %p178, %p179
      %p181 = pneg %p180
      // Predicated region
      $region29: #{_stage1_impl.3} parent=5 // pred_check
        _
      $region30: #{_stage1_impl.3} parent=5 // pred_check_branch
        %183 = sbr.rel (%p180) target = $region32
      $region31: #{_stage1_impl.3} parent=5 // pred_region
        %s184 = ssub.s32 %s17, 1
        %p185 = pneg %p38
        %p186 = pneg %p35
        %p187 = scmp.lt.s32.totalorder %s22, 1
        %s188 = scalar_select %p187, %s22, 1
        %s189 = smul.addr %s188, 4
        %s190 = scalar_lea.vmem %s1, %s189
        %p191 = pneg %p64
        %p192 = pneg %p61
        %p193 = scmp.lt.s32.totalorder %s22, 1
        %s194 = scalar_select %p193, %s22, 1
        %s195 = smul.addr %s194, 8
        %s196 = scalar_lea.vmem %s2, %s195
        %p197 = pneg %p90
        %p198 = pneg %p87
        %p199 = pneg %p116
        %p200 = pneg %p113
        %s201 = sand.u32 %s103, 1
        %s202 = scalar_lea.sflag [#allocation3], %s201
        %s203 = sand.u32 %s103, 1
        %s204 = smul.addr %s203, 8
        %s205 = scalar_lea.vmem [#allocation2], %s204
        %p206 = pneg %p142
        %p207 = pneg %p139
        %s208 = sand.u32 %s129, 1
        %s209 = scalar_lea.sflag [#allocation5], %s208
        %s210 = sand.u32 %s129, 1
        %s211 = smul.addr %s210, 8
        %s212 = scalar_lea.vmem [#allocation4], %s211
        %p213 = scmp.lt.s32.totalorder %s22, 1
        %s214 = scalar_select %p213, %s22, 1
        %s215 = smul.addr %s214, 4
        %s216 = scalar_lea.vmem %s1, %s215
        %p217 = scmp.lt.s32.totalorder %s22, 1
        %s218 = scalar_select %p217, %s22, 1
        %s219 = smul.addr %s218, 8
        %s220 = scalar_lea.vmem %s2, %s219
        %v221 = vld [vmem:[%s220] sm:$0xff]
        %223 = vrot.lane.b32.xlu0 %v221, 2
        %v224 = vpop.permute.xlu0 %223
        %v226 = vsub.f32 %v221, %v224
        %228 = vrot.lane.b32.xlu0 %v226, 127
        %v229 = vpop.permute.xlu0 %228
        %v231 = vmul.f32 %v226, %v229
        %v232 = vld [vmem:[%s0] sm:$0xf]
        %v233 = vperm.slane %v232, 0
        %234 = vset.pattern.permute.xlu0 0
        %235 = vperm.xlu0 %234, %v221
        %v236 = vpop.permute.xlu0 %235
        %v238 = vmax.f32 %v233, %v236
        %v239 = vperm.slane %v232, 1
        %240 = vset.pattern.permute.xlu0 1
        %241 = vperm.xlu0 %240, %v221
        %v242 = vpop.permute.xlu0 %241
        %v244 = vmax.f32 %v239, %v242
        %v245 = vperm.slane %v232, 2
        %246 = vset.pattern.permute.xlu0 2
        %247 = vperm.xlu0 %246, %v221
        %v248 = vpop.permute.xlu0 %247
        %v250 = vmin.f32 %v245, %v248
        %v251 = vperm.slane %v232, 3
        %252 = vset.pattern.permute.xlu0 3
        %253 = vperm.xlu0 %252, %v221
        %v254 = vpop.permute.xlu0 %253
        %v256 = vmin.f32 %v251, %v254
        %v257 = vsub.f32 %v250, %v238
        %v258 = vsub.f32 %v256, %v244
        %v259 = vmul.f32 %v257, %v258
        %vm260 = vcmp.lt.f32.partialorder %v238, %v250
        %vm261 = vcmp.lt.f32.partialorder %v244, %v256
        %vm262 = vmand %vm260, %vm261
        %v263 = vsel %vm262, 1, 0
        %v264 = vcvt.s32.f32 %v263
        %v265 = vmul.f32 %v259, %v264
        %v267 = vrot.slane %v232, 6
        %v269 = vsub.f32 %v232, %v267
        %v271 = vrot.slane %v269, 1
        %v273 = vmul.f32 %v269, %v271
        %v274 = vperm.slane %v273, 2
        %276 = vset.pattern.permute.xlu0 2
        %277 = vperm.xlu0 %276, %v231
        %v278 = vpop.permute.xlu0 %277
        %v280 = vadd.f32 %v274, %v278
        %v281 = vsub.f32 %v280, %v265
        %v282 = vmax.f32 %v281, 1e-09
        %v283 = vrcp.pop %v282
        %v284 = vmul.f32 %v282, %v283
        %v285 = vsub.f32 1.0, %v284
        %v286 = vmul.f32 %v283, %v285
        %v287 = vadd.f32 %v283, %v286
        %vm288 = vweird.f32 %v282
        %vm289 = vweird.f32 %v283
        %vm290 = vmor %vm288, %vm289
        %v291 = vsel %vm290, %v283, %v287
        %v292 = vand.u32 2147483647, %v282
        %vm293 = vcmp.eq.f32.partialorder %v292, 8.507059e+37
        %v294 = vand.u32 %v282, 2147483648
        %v295 = vor.u32 1.1754944e-38, %v294
        %v296 = vsel %vm293, %v295, %v291
        %v297 = vmul.f32 %v265, %v296
        %298 = vst [vmem:[%s205] sm:$0xff] %v297
        %v299 = vld [vmem:[%s216] sm:$0xf]
        %v300 = vperm.slane %v299, 0
        %v301 = vmax.f32 %v300, %v236
        %v302 = vperm.slane %v299, 1
        %v303 = vmax.f32 %v302, %v242
        %v304 = vperm.slane %v299, 2
        %v305 = vmin.f32 %v304, %v248
        %v306 = vperm.slane %v299, 3
        %v307 = vmin.f32 %v306, %v254
        %v308 = vsub.f32 %v305, %v301
        %v309 = vsub.f32 %v307, %v303
        %v310 = vmul.f32 %v308, %v309
        %vm311 = vcmp.lt.f32.partialorder %v301, %v305
        %vm312 = vcmp.lt.f32.partialorder %v303, %v307
        %vm313 = vmand %vm311, %vm312
        %v314 = vsel %vm313, 1, 0
        %v315 = vcvt.s32.f32 %v314
        %v316 = vmul.f32 %v310, %v315
        %v318 = vrot.slane %v299, 6
        %v320 = vsub.f32 %v299, %v318
        %v322 = vrot.slane %v320, 1
        %v324 = vmul.f32 %v320, %v322
        %v325 = vperm.slane %v324, 2
        %v326 = vadd.f32 %v325, %v278
        %v327 = vsub.f32 %v326, %v316
        %v328 = vmax.f32 %v327, 1e-09
        %v329 = vrcp.pop %v328
        %v330 = vmul.f32 %v328, %v329
        %v331 = vsub.f32 1.0, %v330
        %v332 = vmul.f32 %v329, %v331
        %v333 = vadd.f32 %v329, %v332
        %vm334 = vweird.f32 %v328
        %vm335 = vweird.f32 %v329
        %vm336 = vmor %vm334, %vm335
        %v337 = vsel %vm336, %v329, %v333
        %v338 = vand.u32 2147483647, %v328
        %vm339 = vcmp.eq.f32.partialorder %v338, 8.507059e+37
        %v340 = vand.u32 %v328, 2147483648
        %v341 = vor.u32 1.1754944e-38, %v340
        %v342 = vsel %vm339, %v341, %v337
        %v343 = vmul.f32 %v316, %v342
        %344 = vst [vmem:[%s212] sm:$0xff] %v343
        %s345 = sand.u32 %s103, 1
        %s346 = scalar_lea.sflag [#allocation3], %s345
        %s347 = sand.u32 %s103, 1
        %s348 = smul.addr %s347, 8
        %s349 = scalar_lea.vmem [#allocation2], %s348
        %s350 = sand.u32 %s129, 1
        %s351 = scalar_lea.sflag [#allocation5], %s350
        %s352 = sand.u32 %s129, 1
        %s353 = smul.addr %s352, 8
        %s354 = scalar_lea.vmem [#allocation4], %s353
        // Predicated region
        $region33: #{_stage1_impl.3} parent=31 // pred_check
          %p355 = pneg %p113
        $region34: #{_stage1_impl.3} parent=31 // pred_check_branch
          %357 = sbr.rel (%p355) target = $region36
        $region35: #{_stage1_impl.3} parent=31 // pred_region
          %359 = vsyncadd %s346, 0
          %s360 = smul.addr %s22, 8
          %s361 = scalar_lea.hbm %s3, %s360
          %s363 = sshll.u32 %s349, 4
          %s364 = int_to_ptr.vmem [resolvable:$true] %s363
          %s365 = sshll.u32 %s361, 4
          %s366 = int_to_ptr.hbm [resolvable:$true] %s365
          %368 = dma.vmem_to_hbm [thread:$0]  %s364, 128, %s366, %s346
        $region36: #{_stage1_impl.3} parent=31 // pred_fallthru
          _
        // Predicated region
        $region37: #{_stage1_impl.3} parent=31 // pred_check
          %p369 = pneg %p139
        $region38: #{_stage1_impl.3} parent=31 // pred_check_branch
          %371 = sbr.rel (%p369) target = $region40
        $region39: #{_stage1_impl.3} parent=31 // pred_region
          %373 = vsyncadd %s351, 0
          %s374 = smul.addr %s22, 8
          %s375 = scalar_lea.hbm %s4, %s374
          %s377 = sshll.u32 %s354, 4
          %s378 = int_to_ptr.vmem [resolvable:$true] %s377
          %s379 = sshll.u32 %s375, 4
          %s380 = int_to_ptr.hbm [resolvable:$true] %s379
          %382 = dma.vmem_to_hbm [thread:$0]  %s378, 128, %s380, %s351
        $region40: #{_stage1_impl.3} parent=31 // pred_fallthru
          _
      $region32: #{_stage1_impl.3} parent=5 // pred_fallthru
        _
      %p383 = scmp.le.s32.totalorder 2, %s17
      // Predicated region
      $region41: #{_stage1_impl.3} parent=5 // pred_check
        %p384 = pneg %p383
      $region42: #{_stage1_impl.3} parent=5 // pred_check_branch
        %386 = sbr.rel (%p384) target = $region44
      $region43: #{_stage1_impl.3} parent=5 // pred_region
        %s387 = ssub.s32 %s17, 2
        // Predicated region
        $region45: #{_stage1_impl.3} parent=43 // pred_check
          %p388 = pneg %p119
        $region46: #{_stage1_impl.3} parent=43 // pred_check_branch
          %390 = sbr.rel (%p388) target = $region48
        $region47: #{_stage1_impl.3} parent=43 // pred_region
          %s391 = sand.u32 %s104, 1
          %s392 = scalar_lea.sflag [#allocation3], %s391
          %s393 = sand.u32 %s104, 1
          %s394 = smul.addr %s393, 8
          %s395 = scalar_lea.vmem [#allocation2], %s394
          %397 = dma.done %s392, 128
        $region48: #{_stage1_impl.3} parent=43 // pred_fallthru
          _
        // Predicated region
        $region49: #{_stage1_impl.3} parent=43 // pred_check
          %p398 = pneg %p145
        $region50: #{_stage1_impl.3} parent=43 // pred_check_branch
          %400 = sbr.rel (%p398) target = $region52
        $region51: #{_stage1_impl.3} parent=43 // pred_region
          %s401 = sand.u32 %s130, 1
          %s402 = scalar_lea.sflag [#allocation5], %s401
          %s403 = sand.u32 %s130, 1
          %s404 = smul.addr %s403, 8
          %s405 = scalar_lea.vmem [#allocation4], %s404
          %407 = dma.done %s402, 128
        $region52: #{_stage1_impl.3} parent=43 // pred_fallthru
          _
      $region44: #{_stage1_impl.3} parent=5 // pred_fallthru
        _
    $region6: #{_stage1_impl.3} parent=1 // loop_footer
      %s21 = sadd.s32 1, %s17
    $region7: #{_stage1_impl.3} parent=1 // loop_footer_branch
      %16 = sbr.rel target = $region3
    $region8: #{_stage1_impl.3} parent=1 // loop_exit
      _
    %408 = vsyncpa [#allocation3], 1
    %s409 = scalar_lea.sflag [#allocation3], 1
    %410 = vsyncpa %s409, 1
    %411 = vsyncpa [#allocation5], 1
    %s412 = scalar_lea.sflag [#allocation5], 1
    %413 = vsyncpa %s412, 1

</llo_original>
